<compile_context>
chip_gen: v7x
topology: tpu7x:2x2x1
jax: 0.10.0
libtpu: 0.0.40
codegen_flags: <defaults>
</compile_context>

<pallas_src>
import math
import numpy as np
import jax
import jax.numpy as jnp
from jax.experimental import pallas as pl
from jax.experimental.pallas import tpu as pltpu

N_NODES = 17  # the module hard-codes 17 joints (W holds 2*17 = 34 per-node weight slabs)


def _round_up(v, m):
    return ((v + m - 1) // m) * m


def sem_graph_conv_kernel(x_ref, w_ref, b_ref, o_ref):
    """One batch tile per grid step.

    x_ref : (TB, 17*Fin)        bf16, node-major flattened features of TB batch rows
    w_ref : (17*Fin, 17*Fout)   bf16, fused graph-conv weight (grid-invariant, resident)
    b_ref : (1, 17*Fout)        f32,  bias tiled per node
    o_ref : (TB, 17*Fout)       f32
    """
    # Single MXU dot: M=TB, K=17*Fin, N=17*Fout -- full row occupancy, f32 accumulation.
    acc = jnp.dot(x_ref[...], w_ref[...], preferred_element_type=jnp.float32)
    # One full-tile, lane-dense store (17*Fout >= 544 lanes -> unmasked vst).
    o_ref[...] = (acc + b_ref[...]).astype(o_ref.dtype)


def sem_graph_conv(x, W, adj_logits, bias, *, tb=256, compute_dtype=jnp.bfloat16):
    """x: (B, 17, Fin); W: (34, Fin, Fout); adj_logits: (17, 17) pre-softmax; bias: (Fout,)."""
    B, N, Fin = x.shape
    assert N == N_NODES and W.shape[0] == 2 * N_NODES and W.shape[1] == Fin
    Fout = W.shape[2]
    K = N * Fin
    Nout = N * Fout

    # ---- parameter-only preprocessing (independent of x: pure weight folding) ----------
    adj = jax.nn.softmax(adj_logits, axis=1)                 # (17, 17)
    eye = jnp.eye(N, dtype=adj.dtype)
    op = adj * eye                                           # diagonal part   (adj*I)
    ed = adj * (1.0 - eye)                                   # off-diag part   (adj*(1-I))
    # W_full block (source m, target n) = op[n,m]*W[m] + ed[n,m]*W[m+17]
    coeff_d = jnp.transpose(op)[:, :, None, None]            # [m, n, 1, 1]
    coeff_e = jnp.transpose(ed)[:, :, None, None]
    w_blocks = coeff_d * W[:N][:, None] + coeff_e * W[N:][:, None]       # (m, n, Fin, Fout)
    w_full = (jnp.transpose(w_blocks, (0, 2, 1, 3))                      # (m, Fin, n, Fout)
              .reshape(K, Nout)
              .astype(compute_dtype))                                    # (17*Fin, 17*Fout)
    bias_full = jnp.tile(bias.reshape(1, Fout), (1, N)).astype(jnp.float32)   # (1, 17*Fout)

    # ---- batch tiling -------------------------------------------------------------------
    # TB rows per grid step (sublane axis -> multiple of 8); pad B up to a multiple of TB.
    TB = max(8, min(_round_up(tb, 8), _round_up(B, 8)))
    Bp = _round_up(B, TB)
    x_flat = x.reshape(B, K).astype(compute_dtype)           # free, contiguous reshape
    if Bp != B:
        x_flat = jnp.pad(x_flat, ((0, Bp - B), (0, 0)))

    # VMEM budget: double-buffered x/out streams + (double-buffered) resident fused weight.
    # Clamp below v7x's 64 MiB physical VMEM; v5e/v6e have 128 MiB so this is conservative.
    bytes_needed = (2 * TB * K * 2            # x tiles, bf16, 2 buffers
                    + 2 * TB * Nout * 4       # out tiles, f32, 2 buffers
                    + 2 * K * Nout * 2        # fused weight, bf16, default Buffered(2)
                    + 2 * Nout * 4)           # bias
    vmem_limit = int(min(max(2 * bytes_needed, 16 * 1024 * 1024), 48 * 1024 * 1024))

    out_flat = pl.pallas_call(
        sem_graph_conv_kernel,
        out_shape=jax.ShapeDtypeStruct((Bp, Nout), jnp.float32),
        grid=(Bp // TB,),                                     # one batch tile per program
        in_specs=[
            pl.BlockSpec((TB, K), lambda i: (i, 0)),          # streamed batch tile of x
            pl.BlockSpec((K, Nout), lambda i: (0, 0)),        # grid-invariant fused weight
            pl.BlockSpec((1, Nout), lambda i: (0, 0)),        # grid-invariant bias
        ],
        out_specs=pl.BlockSpec((TB, Nout), lambda i: (i, 0)),
        compiler_params=pltpu.CompilerParams(
            dimension_semantics=("parallel",),                # batch tiles over v7x's 2 TCs
            vmem_limit_bytes=vmem_limit,
        ),
    )(x_flat, w_full, bias_full)

    return out_flat[:B].reshape(B, N, Fout)


if __name__ == "__main__":
    key = jax.random.PRNGKey(0)
    # Small feature dims (as the module is typically used) but a real batch so the
    # batch-tiled grid has >1 step (grid = 256/128 = 2 -> both v7x TensorCores get work).
    B, Fin, Fout = 256, 32, 32
    N = N_NODES

    # Deterministic skeleton-like adjacency: chain + self loops (defines the adj > 0 mask).
    adj_np = np.zeros((N, N), dtype=np.float32)
    for i in range(N):
        adj_np[i, i] = 1.0
        if i + 1 < N:
            adj_np[i, i + 1] = 1.0
            adj_np[i + 1, i] = 1.0
    mask = adj_np > 0
    rows, cols = np.nonzero(mask)
    nnz = rows.shape[0]

    k_w, k_b, k_x = jax.random.split(key, 3)

    # W: (34, Fin, Fout), xavier_uniform-style with gain 1.414 (deterministic synthetic init)
    gain = 1.414
    a = gain * math.sqrt(6.0 / (Fin + Fout))
    W = jax.random.uniform(k_w, (2 * N, Fin, Fout), jnp.float32, -a, a)

    # e: (1, nnz) initialized to 1 (nn.init.constant_)
    e = jnp.ones((1, nnz), jnp.float32)

    # bias: uniform(-stdv, stdv), stdv = 1/sqrt(out_features)
    stdv = 1.0 / math.sqrt(Fout)
    bias = jax.random.uniform(k_b, (Fout,), jnp.float32, -stdv, stdv)

    # pre-softmax adjacency logits: -9e15 everywhere, e at adj>0 positions (row-major order)
    adj_logits = jnp.full((N, N), -9e15, jnp.float32)
    adj_logits = adj_logits.at[rows, cols].set(e[0])

    x = jax.random.normal(k_x, (B, N, Fin), jnp.float32)

    out = jax.block_until_ready(sem_graph_conv(x, W, adj_logits, bias, tb=128))

    # pure-JAX f32 reference for correctness (tolerance loosened for bf16 operands)
    adj_sm = jax.nn.softmax(adj_logits, axis=1)
    eye = jnp.eye(N, dtype=jnp.float32)
    op = adj_sm * eye
    ed = adj_sm * (1.0 - eye)
    h0 = jnp.einsum('bnf,nfo->bno', x, W[:N])
    h1 = jnp.einsum('bnf,nfo->bno', x, W[N:])
    ref = (jnp.einsum('nm,bmo->bno', op, h0)
           + jnp.einsum('nm,bmo->bno', ed, h1)
           + bias[None, None, :])

    assert out.shape == (B, N, Fout)
    np.testing.assert_allclose(np.asarray(out), np.asarray(ref), atol=3e-2, rtol=3e-2)
    print("KERNEL_OK")
</pallas_src>

<mosaic_0001>
module attributes {stable_mosaic.version = 11 : i64} {
  func.func @sem_graph_conv_kernel(%arg0: i32, %arg1: memref<128x544xbf16, #tpu.memory_space<vmem>>, %arg2: memref<544x544xbf16, #tpu.memory_space<vmem>>, %arg3: memref<1x544xf32, #tpu.memory_space<vmem>>, %arg4: memref<128x544xf32, #tpu.memory_space<vmem>>) attributes {dimension_semantics = [#tpu.dimension_semantics<parallel>], iteration_bounds = array<i64: 2>, scalar_prefetch = 0 : i64, scratch_operands = 0 : i64, tpu.core_type = #tpu.core_type<tc>, window_params = [{transform_indices = @transform_0, window_bounds = array<i64: 128, 544>}, {pipeline_mode = #tpu.pipeline_mode<synchronous>, transform_indices = @transform_1, window_bounds = array<i64: 544, 544>}, {pipeline_mode = #tpu.pipeline_mode<synchronous>, transform_indices = @transform_2, window_bounds = array<i64: 1, 544>}, {transform_indices = @transform_3, window_bounds = array<i64: 128, 544>}]} {
    %c0 = arith.constant 0 : index
    %c0_0 = arith.constant 0 : index
    %0 = vector.load %arg1[%c0, %c0_0] : memref<128x544xbf16, #tpu.memory_space<vmem>>, vector<128x544xbf16>
    %c0_1 = arith.constant 0 : index
    %c0_2 = arith.constant 0 : index
    %1 = vector.load %arg2[%c0_1, %c0_2] : memref<544x544xbf16, #tpu.memory_space<vmem>>, vector<544x544xbf16>
    %cst = arith.constant dense<0.000000e+00> : vector<128x544xf32>
    %2 = tpu.matmul %0, %1, %cst {dimension_numbers = #tpu.dot_dimension_numbers<[1], [0], [0], [1], [0, 0, 1, 1], [], []>} : vector<128x544xbf16>, vector<544x544xbf16>, vector<128x544xf32> -> vector<128x544xf32>
    %c0_3 = arith.constant 0 : index
    %c0_4 = arith.constant 0 : index
    %3 = vector.load %arg3[%c0_3, %c0_4] : memref<1x544xf32, #tpu.memory_space<vmem>>, vector<1x544xf32>
    %4 = vector.broadcast %3 : vector<1x544xf32> to vector<128x544xf32>
    %5 = arith.addf %2, %4 : vector<128x544xf32>
    %c0_5 = arith.constant 0 : index
    %c0_6 = arith.constant 0 : index
    %6 = vector.load %arg4[%c0_5, %c0_6] : memref<128x544xf32, #tpu.memory_space<vmem>>, vector<128x544xf32>
    tpu.vector_store %arg4[%c0_5, %c0_6], %5 {strides = array<i32>} : memref<128x544xf32, #tpu.memory_space<vmem>>, vector<128x544xf32>,
    return
  }
  func.func @transform_0(%arg0: i32) -> (i32, i32) {
    %c0_i32 = arith.constant 0 : i32
    %c0_i32_0 = arith.constant 0 : i32
    return %arg0, %c0_i32 : i32, i32
  }
  func.func @transform_1(%arg0: i32) -> (i32, i32) {
    %c0_i32 = arith.constant 0 : i32
    %c0_i32_0 = arith.constant 0 : i32
    %c0_i32_1 = arith.constant 0 : i32
    return %c0_i32, %c0_i32_0 : i32, i32
  }
  func.func @transform_2(%arg0: i32) -> (i32, i32) {
    %c0_i32 = arith.constant 0 : i32
    %c0_i32_0 = arith.constant 0 : i32
    %c0_i32_1 = arith.constant 0 : i32
    return %c0_i32, %c0_i32_0 : i32, i32
  }
  func.func @transform_3(%arg0: i32) -> (i32, i32) {
    %c0_i32 = arith.constant 0 : i32
    %c0_i32_0 = arith.constant 0 : i32
    return %arg0, %c0_i32 : i32, i32
  }
}

</mosaic_0001>

<llo_original>
// kernel: tpu_custom_call.1
$region0: #{tpu_custom_call.1}
  #allocation0 [shape = 'u32[]', space=smem, size = 0x4, offset = 0x4, fixed_abs, tag = 'smem constant byte address 0x4 - core index']
  #allocation1 [shape = 'u32[144,128]{1,0:T(1,128)}', space=vmem, size = 0x12000, scoped, tag = 'internal scratch']
  %s0 = inlined_call_operand.vmem [shape: bf16[256,544], index: 0, kind: input, shape index: {}]
  %s1 = inlined_call_operand.hbm [shape: bf16[544,544], index: 1, kind: input, shape index: {}]
  %s2 = inlined_call_operand.vmem [shape: f32[1,544], index: 2, kind: input, shape index: {}]
  %s3 = inlined_call_operand.vmem [shape: f32[256,544], index: 3, kind: output, shape index: {}]
  %s4 = sld [smem:[#allocation0]]
  $region49: #{tpu_custom_call.1} parent=0
    _
  %s6 = ssub.s32 1, %s4
  %s7 = scalar_select 0, %s6, %s4
  $region1: #{tpu_custom_call.1} parent=0
    #allocation2 [shape = 'u8[696320]{0}', space=vmem, size = 0xaa000, scoped, tag = 'input window, operand 1, single buffered']
    #allocation3 [shape = 's32[2]{0}', space=sflag, size = 0x8, scoped, tag = 'scoped memory for tpu_custom_call.1']
    %8 = vsyncpa [#allocation3], 0
    loop: start=0, step=1, limit=4
    $region2: #{tpu_custom_call.1} parent=1 // loop_pre_header
      _
    $region3: #{tpu_custom_call.1} parent=1 // loop_header
      %s10 = sphi 0, %s14
      %p11 = scmp.ge.s32.totalorder %s10, 4
      %s20 = sphi 0, %s22
      %s23 = sphi 0, %s20
      %s24 = sphi 0, %s23
      %s40 = sphi 0, %s24
      %s44 = sphi 0, %s44
      %s46 = sphi 0, %s44
      %s47 = sphi 0, %s46
      %s61 = sphi 0, %s47
      %s65 = sphi 0, %s65
      %s67 = sphi 0, %s65
      %s68 = sphi 0, %s67
      %s82 = sphi 0, %s68
      %s88 = sphi 0, %s90
      %s91 = sphi 0, %s88
      %s92 = sphi 0, %s91
      %s108 = sphi 0, %s92
    $region4: #{tpu_custom_call.1} parent=1 // loop_header_branch
      %13 = sbr.rel (%p11) target = $region8
    $region5: #{tpu_custom_call.1} parent=1 // loop_body
      %s15 = ssub.s32 %s10, 1
      %s16 = ssub.s32 %s10, 2
      %s17 = sadd.s32 %s10, 1
      %s18 = ssub.s32 %s10, %s17
      %p19 = scmp.eq.s32.totalorder %s18, 0
      %s21 = sadd.s32 %s20, 1
      %s22 = scalar_select %p19, %s20, %s21
      %p25 = pneg %p19
      %p26 = scmp.eq.s32.totalorder %s10, 1
      %p27 = por %p25, %p26
      %p28 = scmp.ne.s32.totalorder %s20, %s23
      %p29 = scmp.eq.s32.totalorder %s10, 0
      %p30 = por %p28, %p29
      %p31 = scmp.ne.s32.totalorder %s20, %s23
      %p32 = scmp.eq.s32.totalorder %s15, 1
      %p33 = por %p31, %p32
      %p34 = scmp.ne.s32.totalorder %s23, %s24
      %p35 = scmp.eq.s32.totalorder %s15, 0
      %p36 = por %p34, %p35
      %p37 = scmp.ne.s32.totalorder %s23, %s24
      %p38 = scmp.eq.s32.totalorder %s16, 1
      %p39 = por %p37, %p38
      %p41 = scmp.ne.s32.totalorder %s24, %s40
      %p42 = scmp.eq.s32.totalorder %s16, 0
      %p43 = por %p41, %p42
      %s45 = sadd.s32 %s44, 1
      %p48 = scmp.eq.s32.totalorder %s10, 1
      %p49 = scmp.ne.s32.totalorder %s44, %s46
      %p50 = scmp.eq.s32.totalorder %s10, 0
      %p51 = por %p49, %p50
      %p52 = scmp.ne.s32.totalorder %s44, %s46
      %p53 = scmp.eq.s32.totalorder %s15, 1
      %p54 = por %p52, %p53
      %p55 = scmp.ne.s32.totalorder %s46, %s47
      %p56 = scmp.eq.s32.totalorder %s15, 0
      %p57 = por %p55, %p56
      %p58 = scmp.ne.s32.totalorder %s46, %s47
      %p59 = scmp.eq.s32.totalorder %s16, 1
      %p60 = por %p58, %p59
      %p62 = scmp.ne.s32.totalorder %s47, %s61
      %p63 = scmp.eq.s32.totalorder %s16, 0
      %p64 = por %p62, %p63
      %s66 = sadd.s32 %s65, 1
      %p69 = scmp.eq.s32.totalorder %s10, 1
      %p70 = scmp.ne.s32.totalorder %s65, %s67
      %p71 = scmp.eq.s32.totalorder %s10, 0
      %p72 = por %p70, %p71
      %p73 = scmp.ne.s32.totalorder %s65, %s67
      %p74 = scmp.eq.s32.totalorder %s15, 1
      %p75 = por %p73, %p74
      %p76 = scmp.ne.s32.totalorder %s67, %s68
      %p77 = scmp.eq.s32.totalorder %s15, 0
      %p78 = por %p76, %p77
      %p79 = scmp.ne.s32.totalorder %s67, %s68
      %p80 = scmp.eq.s32.totalorder %s16, 1
      %p81 = por %p79, %p80
      %p83 = scmp.ne.s32.totalorder %s68, %s82
      %p84 = scmp.eq.s32.totalorder %s16, 0
      %p85 = por %p83, %p84
      %s86 = ssub.s32 %s10, %s17
      %p87 = scmp.eq.s32.totalorder %s86, 0
      %s89 = sadd.s32 %s88, 1
      %s90 = scalar_select %p87, %s88, %s89
      %p93 = pneg %p87
      %p94 = scmp.eq.s32.totalorder %s10, 1
      %p95 = por %p93, %p94
      %p96 = scmp.ne.s32.totalorder %s88, %s91
      %p97 = scmp.eq.s32.totalorder %s10, 0
      %p98 = por %p96, %p97
      %p99 = scmp.ne.s32.totalorder %s88, %s91
      %p100 = scmp.eq.s32.totalorder %s15, 1
      %p101 = por %p99, %p100
      %p102 = scmp.ne.s32.totalorder %s91, %s92
      %p103 = scmp.eq.s32.totalorder %s15, 0
      %p104 = por %p102, %p103
      %p105 = scmp.ne.s32.totalorder %s91, %s92
      %p106 = scmp.eq.s32.totalorder %s16, 1
      %p107 = por %p105, %p106
      %p109 = scmp.ne.s32.totalorder %s92, %s108
      %p110 = scmp.eq.s32.totalorder %s16, 0
      %p111 = por %p109, %p110
      %p112 = scmp.le.s32.totalorder 1, %s10
      %p113 = scmp.lt.s32.totalorder %s10, 3
      %p114 = pnand %p112, %p113
      %p115 = pneg %p114
      // Predicated region
      $region9: #{tpu_custom_call.1} parent=5 // pred_check
        _
      $region10: #{tpu_custom_call.1} parent=5 // pred_check_branch
        %117 = sbr.rel (%p114) target = $region12
      $region11: #{tpu_custom_call.1} parent=5 // pred_region
        %s118 = ssub.s32 %s10, 1
        // Predicated region
        $region13: #{tpu_custom_call.1} parent=11 // pred_check
          %p119 = pneg %p57
        $region14: #{tpu_custom_call.1} parent=11 // pred_check_branch
          %121 = sbr.rel (%p119) target = $region16
        $region15: #{tpu_custom_call.1} parent=11 // pred_region
          %s123 = ssub.s32 21760, 21760
          %124 = vsyncadd [#allocation3], %s123
          %s125 = sshll.u32 [#allocation2], 4
          %s126 = int_to_ptr.vmem [resolvable:$true] %s125
          %131 = dma.hbm_to_vmem [thread:$0]  %s1, 21760, %s126, [#allocation3], 320, 320, 20
        $region16: #{tpu_custom_call.1} parent=11 // pred_fallthru
          _
        // Predicated region
        $region17: #{tpu_custom_call.1} parent=11 // pred_check
          %p132 = pneg %p78
        $region18: #{tpu_custom_call.1} parent=11 // pred_check_branch
          %134 = sbr.rel (%p132) target = $region20
        $region19: #{tpu_custom_call.1} parent=11 // pred_region
          _
        $region20: #{tpu_custom_call.1} parent=11 // pred_fallthru
          _
      $region12: #{tpu_custom_call.1} parent=5 // pred_fallthru
        _
      %p135 = scmp.lt.s32.totalorder %s10, 2
      // Predicated region
      $region21: #{tpu_custom_call.1} parent=5 // pred_check
        %p136 = pneg %p135
      $region22: #{tpu_custom_call.1} parent=5 // pred_check_branch
        %138 = sbr.rel (%p136) target = $region24
      $region23: #{tpu_custom_call.1} parent=5 // pred_region
        // Predicated region
        $region25: #{tpu_custom_call.1} parent=23 // pred_check
          %p139 = pneg %p30
        $region26: #{tpu_custom_call.1} parent=23 // pred_check_branch
          %141 = sbr.rel (%p139) target = $region28
        $region27: #{tpu_custom_call.1} parent=23 // pred_region
          %s142 = smul.u32 16, %s10
          %p143 = scmp.lt.s32.totalorder %s142, 31
          %s144 = scalar_select %p143, %s142, 31
          %s145 = smul.addr %s144, 5
          %s146 = smul.addr %s145, 4
          %s147 = scalar_lea.vmem %s0, %s146
          %s148 = smul.u32 16, %s10
        $region28: #{tpu_custom_call.1} parent=23 // pred_fallthru
          _
      $region24: #{tpu_custom_call.1} parent=5 // pred_fallthru
        _
      %p149 = scmp.le.s32.totalorder 1, %s10
      %p150 = scmp.lt.s32.totalorder %s10, 3
      %p151 = pnand %p149, %p150
      %p152 = pneg %p151
      // Predicated region
      $region29: #{tpu_custom_call.1} parent=5 // pred_check
        _
      $region30: #{tpu_custom_call.1} parent=5 // pred_check_branch
        %154 = sbr.rel (%p151) target = $region32
      $region31: #{tpu_custom_call.1} parent=5 // pred_region
        %s155 = ssub.s32 %s10, 1
        // Predicated region
        $region33: #{tpu_custom_call.1} parent=31 // pred_check
          %p156 = pneg %p57
        $region34: #{tpu_custom_call.1} parent=31 // pred_check_branch
          %158 = sbr.rel (%p156) target = $region36
        $region35: #{tpu_custom_call.1} parent=31 // pred_region
          %159 = dma.done [#allocation3], 21760
        $region36: #{tpu_custom_call.1} parent=31 // pred_fallthru
          _
        %s160 = smul.u32 16, %s15
        %p161 = scmp.lt.s32.totalorder %s160, 31
        %s162 = scalar_select %p161, %s160, 31
        %s163 = smul.addr %s162, 5
        %s164 = smul.addr %s163, 4
        %s165 = scalar_lea.vmem %s0, %s164
        %p166 = pneg %p36
        %p167 = pneg %p33
        %p168 = pneg %p57
        %p169 = pneg %p54
        %p170 = pneg %p78
        %p171 = pneg %p75
        %p172 = pneg %p104
        %p173 = pneg %p101
        %s174 = smul.u32 16, %s15
        %p175 = scmp.lt.s32.totalorder %s174, 31
        %s176 = scalar_select %p175, %s174, 31
        %s177 = smul.addr %s176, 5
        %s178 = smul.addr %s177, 8
        %s179 = scalar_lea.vmem %s3, %s178
        %s180 = smul.u32 16, %s15
        %p181 = scmp.lt.s32.totalorder %s180, 31
        %s182 = scalar_select %p181, %s180, 31
        %s183 = smul.addr %s182, 5
        %s184 = smul.addr %s183, 4
        %s185 = scalar_lea.vmem %s0, %s184
        %s186 = smul.u32 16, %s15
        %s187 = smul.u32 16, %s15
        %p188 = scmp.lt.s32.totalorder %s187, 31
        %s189 = scalar_select %p188, %s187, 31
        %s190 = smul.addr %s189, 5
        %s191 = smul.addr %s190, 8
        %s192 = scalar_lea.vmem %s3, %s191
        %s193 = smul.u32 16, %s15
        %v195 = vld [vmem:[%s185] sm:$0xff]
        %v196 = vld [vmem:[%s185 + $0x8] sm:$0xff]
        %v197 = vld [vmem:[%s185 + $0x10] sm:$0xf]
        %v198 = vld [vmem:[%s185 + $0x14] sm:$0xff]
        %v199 = vld [vmem:[%s185 + $0x1c] sm:$0xff]
        %v200 = vld [vmem:[%s185 + $0x24] sm:$0xf]
        %v201 = vld [vmem:[%s185 + $0x28] sm:$0xff]
        %v202 = vld [vmem:[%s185 + $0x30] sm:$0xff]
        %v203 = vld [vmem:[%s185 + $0x38] sm:$0xf]
        %v204 = vld [vmem:[%s185 + $0x3c] sm:$0xff]
        %v205 = vld [vmem:[%s185 + $0x44] sm:$0xff]
        %v206 = vld [vmem:[%s185 + $0x4c] sm:$0xf]
        %v207 = vld [vmem:[%s185 + $0x50] sm:$0xff]
        %v208 = vld [vmem:[%s185 + $0x58] sm:$0xff]
        %v209 = vld [vmem:[%s185 + $0x60] sm:$0xf]
        %v210 = vld [vmem:[%s185 + $0x64] sm:$0xff]
        %v211 = vld [vmem:[%s185 + $0x6c] sm:$0xff]
        %v212 = vld [vmem:[%s185 + $0x74] sm:$0xf]
        %v213 = vld [vmem:[%s185 + $0x78] sm:$0xff]
        %v214 = vld [vmem:[%s185 + $0x80] sm:$0xff]
        %v215 = vld [vmem:[%s185 + $0x88] sm:$0xf]
        %v216 = vld [vmem:[%s185 + $0x8c] sm:$0xff]
        %v217 = vld [vmem:[%s185 + $0x94] sm:$0xff]
        %v218 = vld [vmem:[%s185 + $0x9c] sm:$0xf]
        %v219 = vld [vmem:[%s185 + $0xa0] sm:$0xff]
        %v220 = vld [vmem:[%s185 + $0xa8] sm:$0xff]
        %v221 = vld [vmem:[%s185 + $0xb0] sm:$0xf]
        %v222 = vld [vmem:[%s185 + $0xb4] sm:$0xff]
        %v223 = vld [vmem:[%s185 + $0xbc] sm:$0xff]
        %v224 = vld [vmem:[%s185 + $0xc4] sm:$0xf]
        %v225 = vld [vmem:[%s185 + $0xc8] sm:$0xff]
        %v226 = vld [vmem:[%s185 + $0xd0] sm:$0xff]
        %v227 = vld [vmem:[%s185 + $0xd8] sm:$0xf]
        %v228 = vld [vmem:[%s185 + $0xdc] sm:$0xff]
        %v229 = vld [vmem:[%s185 + $0xe4] sm:$0xff]
        %v230 = vld [vmem:[%s185 + $0xec] sm:$0xf]
        %v231 = vld [vmem:[%s185 + $0xf0] sm:$0xff]
        %v232 = vld [vmem:[%s185 + $0xf8] sm:$0xff]
        %v233 = vld [vmem:[%s185 + $0x100] sm:$0xf]
        %v234 = vld [vmem:[%s185 + $0x104] sm:$0xff]
        %v235 = vld [vmem:[%s185 + $0x10c] sm:$0xff]
        %v236 = vld [vmem:[%s185 + $0x114] sm:$0xf]
        %v237 = vld [vmem:[%s185 + $0x118] sm:$0xff]
        %v238 = vld [vmem:[%s185 + $0x120] sm:$0xff]
        %v239 = vld [vmem:[%s185 + $0x128] sm:$0xf]
        %v240 = vld [vmem:[%s185 + $0x12c] sm:$0xff]
        %v241 = vld [vmem:[%s185 + $0x134] sm:$0xff]
        %v242 = vld [vmem:[%s185 + $0x13c] sm:$0xf]
        %v243 = vld [vmem:[#allocation2] sm:$0xff]
        %v244 = vld [vmem:[#allocation2 + $0x8] sm:$0xff]
        %v245 = vld [vmem:[#allocation2 + $0x10] sm:$0xf]
        %v246 = vld [vmem:[#allocation2 + $0x14] sm:$0xff]
        %v247 = vld [vmem:[#allocation2 + $0x1c] sm:$0xff]
        %v248 = vld [vmem:[#allocation2 + $0x24] sm:$0xf]
        %v249 = vld [vmem:[#allocation2 + $0x28] sm:$0xff]
        %v250 = vld [vmem:[#allocation2 + $0x30] sm:$0xff]
        %v251 = vld [vmem:[#allocation2 + $0x38] sm:$0xf]
        %v252 = vld [vmem:[#allocation2 + $0x3c] sm:$0xff]
        %v253 = vld [vmem:[#allocation2 + $0x44] sm:$0xff]
        %v254 = vld [vmem:[#allocation2 + $0x4c] sm:$0xf]
        %v255 = vld [vmem:[#allocation2 + $0x50] sm:$0xff]
        %v256 = vld [vmem:[#allocation2 + $0x58] sm:$0xff]
        %v257 = vld [vmem:[#allocation2 + $0x60] sm:$0xf]
        %v258 = vld [vmem:[#allocation2 + $0x64] sm:$0xff]
        %v259 = vld [vmem:[#allocation2 + $0x6c] sm:$0xff]
        %v260 = vld [vmem:[#allocation2 + $0x74] sm:$0xf]
        %v261 = vld [vmem:[#allocation2 + $0x78] sm:$0xff]
        %v262 = vld [vmem:[#allocation2 + $0x80] sm:$0xff]
        %v263 = vld [vmem:[#allocation2 + $0x88] sm:$0xf]
        %v264 = vld [vmem:[#allocation2 + $0x8c] sm:$0xff]
        %v265 = vld [vmem:[#allocation2 + $0x94] sm:$0xff]
        %v266 = vld [vmem:[#allocation2 + $0x9c] sm:$0xf]
        %v267 = vld [vmem:[#allocation2 + $0xa0] sm:$0xff]
        %v268 = vld [vmem:[#allocation2 + $0xa8] sm:$0xff]
        %v269 = vld [vmem:[#allocation2 + $0xb0] sm:$0xf]
        %v270 = vld [vmem:[#allocation2 + $0xb4] sm:$0xff]
        %v271 = vld [vmem:[#allocation2 + $0xbc] sm:$0xff]
        %v272 = vld [vmem:[#allocation2 + $0xc4] sm:$0xf]
        %v273 = vld [vmem:[#allocation2 + $0xc8] sm:$0xff]
        %v274 = vld [vmem:[#allocation2 + $0xd0] sm:$0xff]
        %v275 = vld [vmem:[#allocation2 + $0xd8] sm:$0xf]
        %v276 = vld [vmem:[#allocation2 + $0xdc] sm:$0xff]
        %v277 = vld [vmem:[#allocation2 + $0xe4] sm:$0xff]
        %v278 = vld [vmem:[#allocation2 + $0xec] sm:$0xf]
        %v279 = vld [vmem:[#allocation2 + $0xf0] sm:$0xff]
        %v280 = vld [vmem:[#allocation2 + $0xf8] sm:$0xff]
        %v281 = vld [vmem:[#allocation2 + $0x100] sm:$0xf]
        %v282 = vld [vmem:[#allocation2 + $0x104] sm:$0xff]
        %v283 = vld [vmem:[#allocation2 + $0x10c] sm:$0xff]
        %v284 = vld [vmem:[#allocation2 + $0x114] sm:$0xf]
        %v285 = vld [vmem:[#allocation2 + $0x118] sm:$0xff]
        %v286 = vld [vmem:[#allocation2 + $0x120] sm:$0xff]
        %v287 = vld [vmem:[#allocation2 + $0x128] sm:$0xf]
        %v288 = vld [vmem:[#allocation2 + $0x12c] sm:$0xff]
        %v289 = vld [vmem:[#allocation2 + $0x134] sm:$0xff]
        %v290 = vld [vmem:[#allocation2 + $0x13c] sm:$0xf]
        %v291 = vld [vmem:[#allocation2 + $0x140] sm:$0xff]
        %v292 = vld [vmem:[#allocation2 + $0x148] sm:$0xff]
        %v293 = vld [vmem:[#allocation2 + $0x150] sm:$0xf]
        %v294 = vld [vmem:[#allocation2 + $0x154] sm:$0xff]
        %v295 = vld [vmem:[#allocation2 + $0x15c] sm:$0xff]
        %v296 = vld [vmem:[#allocation2 + $0x164] sm:$0xf]
        %v297 = vld [vmem:[#allocation2 + $0x168] sm:$0xff]
        %v298 = vld [vmem:[#allocation2 + $0x170] sm:$0xff]
        %v299 = vld [vmem:[#allocation2 + $0x178] sm:$0xf]
        %v300 = vld [vmem:[#allocation2 + $0x17c] sm:$0xff]
        %v301 = vld [vmem:[#allocation2 + $0x184] sm:$0xff]
        %v302 = vld [vmem:[#allocation2 + $0x18c] sm:$0xf]
        %v303 = vld [vmem:[#allocation2 + $0x190] sm:$0xff]
        %v304 = vld [vmem:[#allocation2 + $0x198] sm:$0xff]
        %v305 = vld [vmem:[#allocation2 + $0x1a0] sm:$0xf]
        %v306 = vld [vmem:[#allocation2 + $0x1a4] sm:$0xff]
        %v307 = vld [vmem:[#allocation2 + $0x1ac] sm:$0xff]
        %v308 = vld [vmem:[#allocation2 + $0x1b4] sm:$0xf]
        %v309 = vld [vmem:[#allocation2 + $0x1b8] sm:$0xff]
        %v310 = vld [vmem:[#allocation2 + $0x1c0] sm:$0xff]
        %v311 = vld [vmem:[#allocation2 + $0x1c8] sm:$0xf]
        %v312 = vld [vmem:[#allocation2 + $0x1cc] sm:$0xff]
        %v313 = vld [vmem:[#allocation2 + $0x1d4] sm:$0xff]
        %v314 = vld [vmem:[#allocation2 + $0x1dc] sm:$0xf]
        %v315 = vld [vmem:[#allocation2 + $0x1e0] sm:$0xff]
        %v316 = vld [vmem:[#allocation2 + $0x1e8] sm:$0xff]
        %v317 = vld [vmem:[#allocation2 + $0x1f0] sm:$0xf]
        %v318 = vld [vmem:[#allocation2 + $0x1f4] sm:$0xff]
        %v319 = vld [vmem:[#allocation2 + $0x1fc] sm:$0xff]
        %v320 = vld [vmem:[#allocation2 + $0x204] sm:$0xf]
        %v321 = vld [vmem:[#allocation2 + $0x208] sm:$0xff]
        %v322 = vld [vmem:[#allocation2 + $0x210] sm:$0xff]
        %v323 = vld [vmem:[#allocation2 + $0x218] sm:$0xf]
        %v324 = vld [vmem:[#allocation2 + $0x21c] sm:$0xff]
        %v325 = vld [vmem:[#allocation2 + $0x224] sm:$0xff]
        %v326 = vld [vmem:[#allocation2 + $0x22c] sm:$0xf]
        %v327 = vld [vmem:[#allocation2 + $0x230] sm:$0xff]
        %v328 = vld [vmem:[#allocation2 + $0x238] sm:$0xff]
        %v329 = vld [vmem:[#allocation2 + $0x240] sm:$0xf]
        %v330 = vld [vmem:[#allocation2 + $0x244] sm:$0xff]
        %v331 = vld [vmem:[#allocation2 + $0x24c] sm:$0xff]
        %v332 = vld [vmem:[#allocation2 + $0x254] sm:$0xf]
        %v333 = vld [vmem:[#allocation2 + $0x258] sm:$0xff]
        %v334 = vld [vmem:[#allocation2 + $0x260] sm:$0xff]
        %v335 = vld [vmem:[#allocation2 + $0x268] sm:$0xf]
        %v336 = vld [vmem:[#allocation2 + $0x26c] sm:$0xff]
        %v337 = vld [vmem:[#allocation2 + $0x274] sm:$0xff]
        %v338 = vld [vmem:[#allocation2 + $0x27c] sm:$0xf]
        %v339 = vld [vmem:[#allocation2 + $0x280] sm:$0xff]
        %v340 = vld [vmem:[#allocation2 + $0x288] sm:$0xff]
        %v341 = vld [vmem:[#allocation2 + $0x290] sm:$0xf]
        %v342 = vld [vmem:[#allocation2 + $0x294] sm:$0xff]
        %v343 = vld [vmem:[#allocation2 + $0x29c] sm:$0xff]
        %v344 = vld [vmem:[#allocation2 + $0x2a4] sm:$0xf]
        %v345 = vld [vmem:[#allocation2 + $0x2a8] sm:$0xff]
        %v346 = vld [vmem:[#allocation2 + $0x2b0] sm:$0xff]
        %v347 = vld [vmem:[#allocation2 + $0x2b8] sm:$0xf]
        %v348 = vld [vmem:[#allocation2 + $0x2bc] sm:$0xff]
        %v349 = vld [vmem:[#allocation2 + $0x2c4] sm:$0xff]
        %v350 = vld [vmem:[#allocation2 + $0x2cc] sm:$0xf]
        %v351 = vld [vmem:[#allocation2 + $0x2d0] sm:$0xff]
        %v352 = vld [vmem:[#allocation2 + $0x2d8] sm:$0xff]
        %v353 = vld [vmem:[#allocation2 + $0x2e0] sm:$0xf]
        %v354 = vld [vmem:[#allocation2 + $0x2e4] sm:$0xff]
        %v355 = vld [vmem:[#allocation2 + $0x2ec] sm:$0xff]
        %v356 = vld [vmem:[#allocation2 + $0x2f4] sm:$0xf]
        %v357 = vld [vmem:[#allocation2 + $0x2f8] sm:$0xff]
        %v358 = vld [vmem:[#allocation2 + $0x300] sm:$0xff]
        %v359 = vld [vmem:[#allocation2 + $0x308] sm:$0xf]
        %v360 = vld [vmem:[#allocation2 + $0x30c] sm:$0xff]
        %v361 = vld [vmem:[#allocation2 + $0x314] sm:$0xff]
        %v362 = vld [vmem:[#allocation2 + $0x31c] sm:$0xf]
        %v363 = vld [vmem:[#allocation2 + $0x320] sm:$0xff]
        %v364 = vld [vmem:[#allocation2 + $0x328] sm:$0xff]
        %v365 = vld [vmem:[#allocation2 + $0x330] sm:$0xf]
        %v366 = vld [vmem:[#allocation2 + $0x334] sm:$0xff]
        %v367 = vld [vmem:[#allocation2 + $0x33c] sm:$0xff]
        %v368 = vld [vmem:[#allocation2 + $0x344] sm:$0xf]
        %v369 = vld [vmem:[#allocation2 + $0x348] sm:$0xff]
        %v370 = vld [vmem:[#allocation2 + $0x350] sm:$0xff]
        %v371 = vld [vmem:[#allocation2 + $0x358] sm:$0xf]
        %v372 = vld [vmem:[#allocation2 + $0x35c] sm:$0xff]
        %v373 = vld [vmem:[#allocation2 + $0x364] sm:$0xff]
        %v374 = vld [vmem:[#allocation2 + $0x36c] sm:$0xf]
        %v375 = vld [vmem:[#allocation2 + $0x370] sm:$0xff]
        %v376 = vld [vmem:[#allocation2 + $0x378] sm:$0xff]
        %v377 = vld [vmem:[#allocation2 + $0x380] sm:$0xf]
        %v378 = vld [vmem:[#allocation2 + $0x384] sm:$0xff]
        %v379 = vld [vmem:[#allocation2 + $0x38c] sm:$0xff]
        %v380 = vld [vmem:[#allocation2 + $0x394] sm:$0xf]
        %v381 = vld [vmem:[#allocation2 + $0x398] sm:$0xff]
        %v382 = vld [vmem:[#allocation2 + $0x3a0] sm:$0xff]
        %v383 = vld [vmem:[#allocation2 + $0x3a8] sm:$0xf]
        %v384 = vld [vmem:[#allocation2 + $0x3ac] sm:$0xff]
        %v385 = vld [vmem:[#allocation2 + $0x3b4] sm:$0xff]
        %v386 = vld [vmem:[#allocation2 + $0x3bc] sm:$0xf]
        %v387 = vld [vmem:[#allocation2 + $0x3c0] sm:$0xff]
        %v388 = vld [vmem:[#allocation2 + $0x3c8] sm:$0xff]
        %v389 = vld [vmem:[#allocation2 + $0x3d0] sm:$0xf]
        %v390 = vld [vmem:[#allocation2 + $0x3d4] sm:$0xff]
        %v391 = vld [vmem:[#allocation2 + $0x3dc] sm:$0xff]
        %v392 = vld [vmem:[#allocation2 + $0x3e4] sm:$0xf]
        %v393 = vld [vmem:[#allocation2 + $0x3e8] sm:$0xff]
        %v394 = vld [vmem:[#allocation2 + $0x3f0] sm:$0xff]
        %v395 = vld [vmem:[#allocation2 + $0x3f8] sm:$0xf]
        %v396 = vld [vmem:[#allocation2 + $0x3fc] sm:$0xff]
        %v397 = vld [vmem:[#allocation2 + $0x404] sm:$0xff]
        %v398 = vld [vmem:[#allocation2 + $0x40c] sm:$0xf]
        %v399 = vld [vmem:[#allocation2 + $0x410] sm:$0xff]
        %v400 = vld [vmem:[#allocation2 + $0x418] sm:$0xff]
        %v401 = vld [vmem:[#allocation2 + $0x420] sm:$0xf]
        %v402 = vld [vmem:[#allocation2 + $0x424] sm:$0xff]
        %v403 = vld [vmem:[#allocation2 + $0x42c] sm:$0xff]
        %v404 = vld [vmem:[#allocation2 + $0x434] sm:$0xf]
        %v405 = vld [vmem:[#allocation2 + $0x438] sm:$0xff]
        %v406 = vld [vmem:[#allocation2 + $0x440] sm:$0xff]
        %v407 = vld [vmem:[#allocation2 + $0x448] sm:$0xf]
        %v408 = vld [vmem:[#allocation2 + $0x44c] sm:$0xff]
        %v409 = vld [vmem:[#allocation2 + $0x454] sm:$0xff]
        %v410 = vld [vmem:[#allocation2 + $0x45c] sm:$0xf]
        %v411 = vld [vmem:[#allocation2 + $0x460] sm:$0xff]
        %v412 = vld [vmem:[#allocation2 + $0x468] sm:$0xff]
        %v413 = vld [vmem:[#allocation2 + $0x470] sm:$0xf]
        %v414 = vld [vmem:[#allocation2 + $0x474] sm:$0xff]
        %v415 = vld [vmem:[#allocation2 + $0x47c] sm:$0xff]
        %v416 = vld [vmem:[#allocation2 + $0x484] sm:$0xf]
        %v417 = vld [vmem:[#allocation2 + $0x488] sm:$0xff]
        %v418 = vld [vmem:[#allocation2 + $0x490] sm:$0xff]
        %v419 = vld [vmem:[#allocation2 + $0x498] sm:$0xf]
        %v420 = vld [vmem:[#allocation2 + $0x49c] sm:$0xff]
        %v421 = vld [vmem:[#allocation2 + $0x4a4] sm:$0xff]
        %v422 = vld [vmem:[#allocation2 + $0x4ac] sm:$0xf]
        %v423 = vld [vmem:[#allocation2 + $0x4b0] sm:$0xff]
        %v424 = vld [vmem:[#allocation2 + $0x4b8] sm:$0xff]
        %v425 = vld [vmem:[#allocation2 + $0x4c0] sm:$0xf]
        %v426 = vld [vmem:[#allocation2 + $0x4c4] sm:$0xff]
        %v427 = vld [vmem:[#allocation2 + $0x4cc] sm:$0xff]
        %v428 = vld [vmem:[#allocation2 + $0x4d4] sm:$0xf]
        %v429 = vld [vmem:[#allocation2 + $0x4d8] sm:$0xff]
        %v430 = vld [vmem:[#allocation2 + $0x4e0] sm:$0xff]
        %v431 = vld [vmem:[#allocation2 + $0x4e8] sm:$0xf]
        %v432 = vld [vmem:[#allocation2 + $0x4ec] sm:$0xff]
        %v433 = vld [vmem:[#allocation2 + $0x4f4] sm:$0xff]
        %v434 = vld [vmem:[#allocation2 + $0x4fc] sm:$0xf]
        %v435 = vld [vmem:[#allocation2 + $0x500] sm:$0xff]
        %v436 = vld [vmem:[#allocation2 + $0x508] sm:$0xff]
        %v437 = vld [vmem:[#allocation2 + $0x510] sm:$0xf]
        %v438 = vld [vmem:[#allocation2 + $0x514] sm:$0xff]
        %v439 = vld [vmem:[#allocation2 + $0x51c] sm:$0xff]
        %v440 = vld [vmem:[#allocation2 + $0x524] sm:$0xf]
        %v441 = vld [vmem:[#allocation2 + $0x528] sm:$0xff]
        %v442 = vld [vmem:[#allocation2 + $0x530] sm:$0xff]
        %v443 = vld [vmem:[#allocation2 + $0x538] sm:$0xf]
        %v444 = vld [vmem:[#allocation2 + $0x53c] sm:$0xff]
        %v445 = vld [vmem:[#allocation2 + $0x544] sm:$0xff]
        %v446 = vld [vmem:[#allocation2 + $0x54c] sm:$0xf]
        %v447 = vld [vmem:[%s2] sm:$0x1f]
        %v449 = vlaneseq
        %v450 = vshrl.u32 %v449, 7
        %v451 = vsub.s32 0, %v450
        %v452 = vrot.slane %v447, %v451
        %v453 = vlaneseq
        %v454 = vshrl.u32 %v453, 7
        %v455 = vsub.s32 1, %v454
        %v456 = vrot.slane %v447, %v455
        %v457 = vlaneseq
        %v458 = vshrl.u32 %v457, 7
        %v459 = vsub.s32 2, %v458
        %v460 = vrot.slane %v447, %v459
        %v461 = vlaneseq
        %v462 = vshrl.u32 %v461, 7
        %v463 = vsub.s32 3, %v462
        %v464 = vrot.slane %v447, %v463
        %v465 = vlaneseq
        %v466 = vshrl.u32 %v465, 7
        %v467 = vsub.s32 4, %v466
        %v468 = vrot.slane %v447, %v467
        %v522 = vunpack.c.l.b16 %v195
        %v523 = vunpack.c.h.b16 %v195
        %v524 = vunpack.c.l.b16 %v196
        %v525 = vunpack.c.h.b16 %v196
        %v526 = vunpack.c.l.b16 %v197
        %v527 = vunpack.c.l.b16 %v198
        %v528 = vunpack.c.h.b16 %v198
        %v529 = vunpack.c.l.b16 %v199
        %v530 = vunpack.c.h.b16 %v199
        %v531 = vunpack.c.l.b16 %v200
        %v532 = vunpack.c.l.b16 %v201
        %v533 = vunpack.c.h.b16 %v201
        %v534 = vunpack.c.l.b16 %v202
        %v535 = vunpack.c.h.b16 %v202
        %v536 = vunpack.c.l.b16 %v203
        %v537 = vunpack.c.l.b16 %v204
        %v538 = vunpack.c.h.b16 %v204
        %v539 = vunpack.c.l.b16 %v205
        %v540 = vunpack.c.h.b16 %v205
        %v541 = vunpack.c.l.b16 %v206
        %v542 = vunpack.c.l.b16 %v207
        %v543 = vunpack.c.h.b16 %v207
        %v544 = vunpack.c.l.b16 %v208
        %v545 = vunpack.c.h.b16 %v208
        %v546 = vunpack.c.l.b16 %v209
        %v547 = vunpack.c.l.b16 %v210
        %v548 = vunpack.c.h.b16 %v210
        %v549 = vunpack.c.l.b16 %v211
        %v550 = vunpack.c.h.b16 %v211
        %v551 = vunpack.c.l.b16 %v212
        %v552 = vunpack.c.l.b16 %v213
        %v553 = vunpack.c.h.b16 %v213
        %v554 = vunpack.c.l.b16 %v214
        %v555 = vunpack.c.h.b16 %v214
        %v556 = vunpack.c.l.b16 %v215
        %v557 = vunpack.c.l.b16 %v216
        %v558 = vunpack.c.h.b16 %v216
        %v559 = vunpack.c.l.b16 %v217
        %v560 = vunpack.c.h.b16 %v217
        %v561 = vunpack.c.l.b16 %v218
        %v562 = vunpack.c.l.b16 %v219
        %v563 = vunpack.c.h.b16 %v219
        %v564 = vunpack.c.l.b16 %v220
        %v565 = vunpack.c.h.b16 %v220
        %v566 = vunpack.c.l.b16 %v221
        %v567 = vunpack.c.l.b16 %v222
        %v568 = vunpack.c.h.b16 %v222
        %v569 = vunpack.c.l.b16 %v223
        %v570 = vunpack.c.h.b16 %v223
        %v571 = vunpack.c.l.b16 %v224
        %v572 = vunpack.c.l.b16 %v225
        %v573 = vunpack.c.h.b16 %v225
        %v574 = vunpack.c.l.b16 %v226
        %v575 = vunpack.c.h.b16 %v226
        %v576 = vunpack.c.l.b16 %v227
        %v577 = vunpack.c.l.b16 %v228
        %v578 = vunpack.c.h.b16 %v228
        %v579 = vunpack.c.l.b16 %v229
        %v580 = vunpack.c.h.b16 %v229
        %v581 = vunpack.c.l.b16 %v230
        %v582 = vunpack.c.l.b16 %v231
        %v583 = vunpack.c.h.b16 %v231
        %v584 = vunpack.c.l.b16 %v232
        %v585 = vunpack.c.h.b16 %v232
        %v586 = vunpack.c.l.b16 %v233
        %v587 = vunpack.c.l.b16 %v234
        %v588 = vunpack.c.h.b16 %v234
        %v589 = vunpack.c.l.b16 %v235
        %v590 = vunpack.c.h.b16 %v235
        %v591 = vunpack.c.l.b16 %v236
        %v592 = vunpack.c.l.b16 %v237
        %v593 = vunpack.c.h.b16 %v237
        %v594 = vunpack.c.l.b16 %v238
        %v595 = vunpack.c.h.b16 %v238
        %v596 = vunpack.c.l.b16 %v239
        %v597 = vunpack.c.l.b16 %v240
        %v598 = vunpack.c.h.b16 %v240
        %v599 = vunpack.c.l.b16 %v241
        %v600 = vunpack.c.h.b16 %v241
        %v601 = vunpack.c.l.b16 %v242
        %v602 = vpack.c.b16 %v527, %v522
        %v603 = vpack.c.b16 %v528, %v523
        %v604 = vpack.c.b16 %v529, %v524
        %v605 = vpack.c.b16 %v530, %v525
        %v606 = vpack.c.b16 %v531, %v526
        %v607 = vpack.c.b16 %v537, %v532
        %v608 = vpack.c.b16 %v538, %v533
        %v609 = vpack.c.b16 %v539, %v534
        %v610 = vpack.c.b16 %v540, %v535
        %v611 = vpack.c.b16 %v541, %v536
        %v612 = vpack.c.b16 %v547, %v542
        %v613 = vpack.c.b16 %v548, %v543
        %v614 = vpack.c.b16 %v549, %v544
        %v615 = vpack.c.b16 %v550, %v545
        %v616 = vpack.c.b16 %v551, %v546
        %v617 = vpack.c.b16 %v557, %v552
        %v618 = vpack.c.b16 %v558, %v553
        %v619 = vpack.c.b16 %v559, %v554
        %v620 = vpack.c.b16 %v560, %v555
        %v621 = vpack.c.b16 %v561, %v556
        %v622 = vpack.c.b16 %v567, %v562
        %v623 = vpack.c.b16 %v568, %v563
        %v624 = vpack.c.b16 %v569, %v564
        %v625 = vpack.c.b16 %v570, %v565
        %v626 = vpack.c.b16 %v571, %v566
        %v627 = vpack.c.b16 %v577, %v572
        %v628 = vpack.c.b16 %v578, %v573
        %v629 = vpack.c.b16 %v579, %v574
        %v630 = vpack.c.b16 %v580, %v575
        %v631 = vpack.c.b16 %v581, %v576
        %v632 = vpack.c.b16 %v587, %v582
        %v633 = vpack.c.b16 %v588, %v583
        %v634 = vpack.c.b16 %v589, %v584
        %v635 = vpack.c.b16 %v590, %v585
        %v636 = vpack.c.b16 %v591, %v586
        %v637 = vpack.c.b16 %v597, %v592
        %v638 = vpack.c.b16 %v598, %v593
        %v639 = vpack.c.b16 %v599, %v594
        %v640 = vpack.c.b16 %v600, %v595
        %v641 = vpack.c.b16 %v601, %v596
        %v878 = vunpack.c.l.b16 %v243
        %v879 = vunpack.c.h.b16 %v243
        %v880 = vunpack.c.l.b16 %v244
        %v881 = vunpack.c.h.b16 %v244
        %v882 = vunpack.c.l.b16 %v245
        %v883 = vunpack.c.l.b16 %v246
        %v884 = vunpack.c.h.b16 %v246
        %v885 = vunpack.c.l.b16 %v247
        %v886 = vunpack.c.h.b16 %v247
        %v887 = vunpack.c.l.b16 %v248
        %v888 = vunpack.c.l.b16 %v249
        %v889 = vunpack.c.h.b16 %v249
        %v890 = vunpack.c.l.b16 %v250
        %v891 = vunpack.c.h.b16 %v250
        %v892 = vunpack.c.l.b16 %v251
        %v893 = vunpack.c.l.b16 %v252
        %v894 = vunpack.c.h.b16 %v252
        %v895 = vunpack.c.l.b16 %v253
        %v896 = vunpack.c.h.b16 %v253
        %v897 = vunpack.c.l.b16 %v254
        %v898 = vunpack.c.l.b16 %v255
        %v899 = vunpack.c.h.b16 %v255
        %v900 = vunpack.c.l.b16 %v256
        %v901 = vunpack.c.h.b16 %v256
        %v902 = vunpack.c.l.b16 %v257
        %v903 = vunpack.c.l.b16 %v258
        %v904 = vunpack.c.h.b16 %v258
        %v905 = vunpack.c.l.b16 %v259
        %v906 = vunpack.c.h.b16 %v259
        %v907 = vunpack.c.l.b16 %v260
        %v908 = vunpack.c.l.b16 %v261
        %v909 = vunpack.c.h.b16 %v261
        %v910 = vunpack.c.l.b16 %v262
        %v911 = vunpack.c.h.b16 %v262
        %v912 = vunpack.c.l.b16 %v263
        %v913 = vunpack.c.l.b16 %v264
        %v914 = vunpack.c.h.b16 %v264
        %v915 = vunpack.c.l.b16 %v265
        %v916 = vunpack.c.h.b16 %v265
        %v917 = vunpack.c.l.b16 %v266
        %v918 = vunpack.c.l.b16 %v267
        %v919 = vunpack.c.h.b16 %v267
        %v920 = vunpack.c.l.b16 %v268
        %v921 = vunpack.c.h.b16 %v268
        %v922 = vunpack.c.l.b16 %v269
        %v923 = vunpack.c.l.b16 %v270
        %v924 = vunpack.c.h.b16 %v270
        %v925 = vunpack.c.l.b16 %v271
        %v926 = vunpack.c.h.b16 %v271
        %v927 = vunpack.c.l.b16 %v272
        %v928 = vunpack.c.l.b16 %v273
        %v929 = vunpack.c.h.b16 %v273
        %v930 = vunpack.c.l.b16 %v274
        %v931 = vunpack.c.h.b16 %v274
        %v932 = vunpack.c.l.b16 %v275
        %v933 = vunpack.c.l.b16 %v276
        %v934 = vunpack.c.h.b16 %v276
        %v935 = vunpack.c.l.b16 %v277
        %v936 = vunpack.c.h.b16 %v277
        %v937 = vunpack.c.l.b16 %v278
        %v938 = vunpack.c.l.b16 %v279
        %v939 = vunpack.c.h.b16 %v279
        %v940 = vunpack.c.l.b16 %v280
        %v941 = vunpack.c.h.b16 %v280
        %v942 = vunpack.c.l.b16 %v281
        %v943 = vunpack.c.l.b16 %v282
        %v944 = vunpack.c.h.b16 %v282
        %v945 = vunpack.c.l.b16 %v283
        %v946 = vunpack.c.h.b16 %v283
        %v947 = vunpack.c.l.b16 %v284
        %v948 = vunpack.c.l.b16 %v285
        %v949 = vunpack.c.h.b16 %v285
        %v950 = vunpack.c.l.b16 %v286
        %v951 = vunpack.c.h.b16 %v286
        %v952 = vunpack.c.l.b16 %v287
        %v953 = vunpack.c.l.b16 %v288
        %v954 = vunpack.c.h.b16 %v288
        %v955 = vunpack.c.l.b16 %v289
        %v956 = vunpack.c.h.b16 %v289
        %v957 = vunpack.c.l.b16 %v290
        %v958 = vunpack.c.l.b16 %v291
        %v959 = vunpack.c.h.b16 %v291
        %v960 = vunpack.c.l.b16 %v292
        %v961 = vunpack.c.h.b16 %v292
        %v962 = vunpack.c.l.b16 %v293
        %v963 = vunpack.c.l.b16 %v294
        %v964 = vunpack.c.h.b16 %v294
        %v965 = vunpack.c.l.b16 %v295
        %v966 = vunpack.c.h.b16 %v295
        %v967 = vunpack.c.l.b16 %v296
        %v968 = vunpack.c.l.b16 %v297
        %v969 = vunpack.c.h.b16 %v297
        %v970 = vunpack.c.l.b16 %v298
        %v971 = vunpack.c.h.b16 %v298
        %v972 = vunpack.c.l.b16 %v299
        %v973 = vunpack.c.l.b16 %v300
        %v974 = vunpack.c.h.b16 %v300
        %v975 = vunpack.c.l.b16 %v301
        %v976 = vunpack.c.h.b16 %v301
        %v977 = vunpack.c.l.b16 %v302
        %v978 = vunpack.c.l.b16 %v303
        %v979 = vunpack.c.h.b16 %v303
        %v980 = vunpack.c.l.b16 %v304
        %v981 = vunpack.c.h.b16 %v304
        %v982 = vunpack.c.l.b16 %v305
        %v983 = vunpack.c.l.b16 %v306
        %v984 = vunpack.c.h.b16 %v306
        %v985 = vunpack.c.l.b16 %v307
        %v986 = vunpack.c.h.b16 %v307
        %v987 = vunpack.c.l.b16 %v308
        %v988 = vunpack.c.l.b16 %v309
        %v989 = vunpack.c.h.b16 %v309
        %v990 = vunpack.c.l.b16 %v310
        %v991 = vunpack.c.h.b16 %v310
        %v992 = vunpack.c.l.b16 %v311
        %v993 = vunpack.c.l.b16 %v312
        %v994 = vunpack.c.h.b16 %v312
        %v995 = vunpack.c.l.b16 %v313
        %v996 = vunpack.c.h.b16 %v313
        %v997 = vunpack.c.l.b16 %v314
        %v998 = vunpack.c.l.b16 %v315
        %v999 = vunpack.c.h.b16 %v315
        %v1000 = vunpack.c.l.b16 %v316
        %v1001 = vunpack.c.h.b16 %v316
        %v1002 = vunpack.c.l.b16 %v317
        %v1003 = vunpack.c.l.b16 %v318
        %v1004 = vunpack.c.h.b16 %v318
        %v1005 = vunpack.c.l.b16 %v319
        %v1006 = vunpack.c.h.b16 %v319
        %v1007 = vunpack.c.l.b16 %v320
        %v1008 = vunpack.c.l.b16 %v321
        %v1009 = vunpack.c.h.b16 %v321
        %v1010 = vunpack.c.l.b16 %v322
        %v1011 = vunpack.c.h.b16 %v322
        %v1012 = vunpack.c.l.b16 %v323
        %v1013 = vunpack.c.l.b16 %v324
        %v1014 = vunpack.c.h.b16 %v324
        %v1015 = vunpack.c.l.b16 %v325
        %v1016 = vunpack.c.h.b16 %v325
        %v1017 = vunpack.c.l.b16 %v326
        %v1018 = vunpack.c.l.b16 %v327
        %v1019 = vunpack.c.h.b16 %v327
        %v1020 = vunpack.c.l.b16 %v328
        %v1021 = vunpack.c.h.b16 %v328
        %v1022 = vunpack.c.l.b16 %v329
        %v1023 = vunpack.c.l.b16 %v330
        %v1024 = vunpack.c.h.b16 %v330
        %v1025 = vunpack.c.l.b16 %v331
        %v1026 = vunpack.c.h.b16 %v331
        %v1027 = vunpack.c.l.b16 %v332
        %v1028 = vunpack.c.l.b16 %v333
        %v1029 = vunpack.c.h.b16 %v333
        %v1030 = vunpack.c.l.b16 %v334
        %v1031 = vunpack.c.h.b16 %v334
        %v1032 = vunpack.c.l.b16 %v335
        %v1033 = vunpack.c.l.b16 %v336
        %v1034 = vunpack.c.h.b16 %v336
        %v1035 = vunpack.c.l.b16 %v337
        %v1036 = vunpack.c.h.b16 %v337
        %v1037 = vunpack.c.l.b16 %v338
        %v1038 = vunpack.c.l.b16 %v339
        %v1039 = vunpack.c.h.b16 %v339
        %v1040 = vunpack.c.l.b16 %v340
        %v1041 = vunpack.c.h.b16 %v340
        %v1042 = vunpack.c.l.b16 %v341
        %v1043 = vunpack.c.l.b16 %v342
        %v1044 = vunpack.c.h.b16 %v342
        %v1045 = vunpack.c.l.b16 %v343
        %v1046 = vunpack.c.h.b16 %v343
        %v1047 = vunpack.c.l.b16 %v344
        %v1048 = vunpack.c.l.b16 %v345
        %v1049 = vunpack.c.h.b16 %v345
        %v1050 = vunpack.c.l.b16 %v346
        %v1051 = vunpack.c.h.b16 %v346
        %v1052 = vunpack.c.l.b16 %v347
        %v1053 = vunpack.c.l.b16 %v348
        %v1054 = vunpack.c.h.b16 %v348
        %v1055 = vunpack.c.l.b16 %v349
        %v1056 = vunpack.c.h.b16 %v349
        %v1057 = vunpack.c.l.b16 %v350
        %v1058 = vunpack.c.l.b16 %v351
        %v1059 = vunpack.c.h.b16 %v351
        %v1060 = vunpack.c.l.b16 %v352
        %v1061 = vunpack.c.h.b16 %v352
        %v1062 = vunpack.c.l.b16 %v353
        %v1063 = vunpack.c.l.b16 %v354
        %v1064 = vunpack.c.h.b16 %v354
        %v1065 = vunpack.c.l.b16 %v355
        %v1066 = vunpack.c.h.b16 %v355
        %v1067 = vunpack.c.l.b16 %v356
        %v1068 = vunpack.c.l.b16 %v357
        %v1069 = vunpack.c.h.b16 %v357
        %v1070 = vunpack.c.l.b16 %v358
        %v1071 = vunpack.c.h.b16 %v358
        %v1072 = vunpack.c.l.b16 %v359
        %v1073 = vunpack.c.l.b16 %v360
        %v1074 = vunpack.c.h.b16 %v360
        %v1075 = vunpack.c.l.b16 %v361
        %v1076 = vunpack.c.h.b16 %v361
        %v1077 = vunpack.c.l.b16 %v362
        %v1078 = vunpack.c.l.b16 %v363
        %v1079 = vunpack.c.h.b16 %v363
        %v1080 = vunpack.c.l.b16 %v364
        %v1081 = vunpack.c.h.b16 %v364
        %v1082 = vunpack.c.l.b16 %v365
        %v1083 = vunpack.c.l.b16 %v366
        %v1084 = vunpack.c.h.b16 %v366
        %v1085 = vunpack.c.l.b16 %v367
        %v1086 = vunpack.c.h.b16 %v367
        %v1087 = vunpack.c.l.b16 %v368
        %v1088 = vunpack.c.l.b16 %v369
        %v1089 = vunpack.c.h.b16 %v369
        %v1090 = vunpack.c.l.b16 %v370
        %v1091 = vunpack.c.h.b16 %v370
        %v1092 = vunpack.c.l.b16 %v371
        %v1093 = vunpack.c.l.b16 %v372
        %v1094 = vunpack.c.h.b16 %v372
        %v1095 = vunpack.c.l.b16 %v373
        %v1096 = vunpack.c.h.b16 %v373
        %v1097 = vunpack.c.l.b16 %v374
        %v1098 = vunpack.c.l.b16 %v375
        %v1099 = vunpack.c.h.b16 %v375
        %v1100 = vunpack.c.l.b16 %v376
        %v1101 = vunpack.c.h.b16 %v376
        %v1102 = vunpack.c.l.b16 %v377
        %v1103 = vunpack.c.l.b16 %v378
        %v1104 = vunpack.c.h.b16 %v378
        %v1105 = vunpack.c.l.b16 %v379
        %v1106 = vunpack.c.h.b16 %v379
        %v1107 = vunpack.c.l.b16 %v380
        %v1108 = vunpack.c.l.b16 %v381
        %v1109 = vunpack.c.h.b16 %v381
        %v1110 = vunpack.c.l.b16 %v382
        %v1111 = vunpack.c.h.b16 %v382
        %v1112 = vunpack.c.l.b16 %v383
        %v1113 = vunpack.c.l.b16 %v384
        %v1114 = vunpack.c.h.b16 %v384
        %v1115 = vunpack.c.l.b16 %v385
        %v1116 = vunpack.c.h.b16 %v385
        %v1117 = vunpack.c.l.b16 %v386
        %v1118 = vunpack.c.l.b16 %v387
        %v1119 = vunpack.c.h.b16 %v387
        %v1120 = vunpack.c.l.b16 %v388
        %v1121 = vunpack.c.h.b16 %v388
        %v1122 = vunpack.c.l.b16 %v389
        %v1123 = vunpack.c.l.b16 %v390
        %v1124 = vunpack.c.h.b16 %v390
        %v1125 = vunpack.c.l.b16 %v391
        %v1126 = vunpack.c.h.b16 %v391
        %v1127 = vunpack.c.l.b16 %v392
        %v1128 = vunpack.c.l.b16 %v393
        %v1129 = vunpack.c.h.b16 %v393
        %v1130 = vunpack.c.l.b16 %v394
        %v1131 = vunpack.c.h.b16 %v394
        %v1132 = vunpack.c.l.b16 %v395
        %v1133 = vunpack.c.l.b16 %v396
        %v1134 = vunpack.c.h.b16 %v396
        %v1135 = vunpack.c.l.b16 %v397
        %v1136 = vunpack.c.h.b16 %v397
        %v1137 = vunpack.c.l.b16 %v398
        %v1138 = vunpack.c.l.b16 %v399
        %v1139 = vunpack.c.h.b16 %v399
        %v1140 = vunpack.c.l.b16 %v400
        %v1141 = vunpack.c.h.b16 %v400
        %v1142 = vunpack.c.l.b16 %v401
        %v1143 = vunpack.c.l.b16 %v402
        %v1144 = vunpack.c.h.b16 %v402
        %v1145 = vunpack.c.l.b16 %v403
        %v1146 = vunpack.c.h.b16 %v403
        %v1147 = vunpack.c.l.b16 %v404
        %v1148 = vunpack.c.l.b16 %v405
        %v1149 = vunpack.c.h.b16 %v405
        %v1150 = vunpack.c.l.b16 %v406
        %v1151 = vunpack.c.h.b16 %v406
        %v1152 = vunpack.c.l.b16 %v407
        %v1153 = vunpack.c.l.b16 %v408
        %v1154 = vunpack.c.h.b16 %v408
        %v1155 = vunpack.c.l.b16 %v409
        %v1156 = vunpack.c.h.b16 %v409
        %v1157 = vunpack.c.l.b16 %v410
        %v1158 = vunpack.c.l.b16 %v411
        %v1159 = vunpack.c.h.b16 %v411
        %v1160 = vunpack.c.l.b16 %v412
        %v1161 = vunpack.c.h.b16 %v412
        %v1162 = vunpack.c.l.b16 %v413
        %v1163 = vunpack.c.l.b16 %v414
        %v1164 = vunpack.c.h.b16 %v414
        %v1165 = vunpack.c.l.b16 %v415
        %v1166 = vunpack.c.h.b16 %v415
        %v1167 = vunpack.c.l.b16 %v416
        %v1168 = vunpack.c.l.b16 %v417
        %v1169 = vunpack.c.h.b16 %v417
        %v1170 = vunpack.c.l.b16 %v418
        %v1171 = vunpack.c.h.b16 %v418
        %v1172 = vunpack.c.l.b16 %v419
        %v1173 = vunpack.c.l.b16 %v420
        %v1174 = vunpack.c.h.b16 %v420
        %v1175 = vunpack.c.l.b16 %v421
        %v1176 = vunpack.c.h.b16 %v421
        %v1177 = vunpack.c.l.b16 %v422
        %v1178 = vunpack.c.l.b16 %v423
        %v1179 = vunpack.c.h.b16 %v423
        %v1180 = vunpack.c.l.b16 %v424
        %v1181 = vunpack.c.h.b16 %v424
        %v1182 = vunpack.c.l.b16 %v425
        %v1183 = vunpack.c.l.b16 %v426
        %v1184 = vunpack.c.h.b16 %v426
        %v1185 = vunpack.c.l.b16 %v427
        %v1186 = vunpack.c.h.b16 %v427
        %v1187 = vunpack.c.l.b16 %v428
        %v1188 = vunpack.c.l.b16 %v429
        %v1189 = vunpack.c.h.b16 %v429
        %v1190 = vunpack.c.l.b16 %v430
        %v1191 = vunpack.c.h.b16 %v430
        %v1192 = vunpack.c.l.b16 %v431
        %v1193 = vunpack.c.l.b16 %v432
        %v1194 = vunpack.c.h.b16 %v432
        %v1195 = vunpack.c.l.b16 %v433
        %v1196 = vunpack.c.h.b16 %v433
        %v1197 = vunpack.c.l.b16 %v434
        %v1198 = vunpack.c.l.b16 %v435
        %v1199 = vunpack.c.h.b16 %v435
        %v1200 = vunpack.c.l.b16 %v436
        %v1201 = vunpack.c.h.b16 %v436
        %v1202 = vunpack.c.l.b16 %v437
        %v1203 = vunpack.c.l.b16 %v438
        %v1204 = vunpack.c.h.b16 %v438
        %v1205 = vunpack.c.l.b16 %v439
        %v1206 = vunpack.c.h.b16 %v439
        %v1207 = vunpack.c.l.b16 %v440
        %v1208 = vunpack.c.l.b16 %v441
        %v1209 = vunpack.c.h.b16 %v441
        %v1210 = vunpack.c.l.b16 %v442
        %v1211 = vunpack.c.h.b16 %v442
        %v1212 = vunpack.c.l.b16 %v443
        %v1213 = vunpack.c.l.b16 %v444
        %v1214 = vunpack.c.h.b16 %v444
        %v1215 = vunpack.c.l.b16 %v445
        %v1216 = vunpack.c.h.b16 %v445
        %v1217 = vunpack.c.l.b16 %v446
        %v1218 = vpack.c.b16 %v883, %v878
        %v1219 = vpack.c.b16 %v884, %v879
        %v1220 = vpack.c.b16 %v885, %v880
        %v1221 = vpack.c.b16 %v886, %v881
        %v1222 = vpack.c.b16 %v887, %v882
        %v1223 = vpack.c.b16 %v893, %v888
        %v1224 = vpack.c.b16 %v894, %v889
        %v1225 = vpack.c.b16 %v895, %v890
        %v1226 = vpack.c.b16 %v896, %v891
        %v1227 = vpack.c.b16 %v897, %v892
        %v1228 = vpack.c.b16 %v903, %v898
        %v1229 = vpack.c.b16 %v904, %v899
        %v1230 = vpack.c.b16 %v905, %v900
        %v1231 = vpack.c.b16 %v906, %v901
        %v1232 = vpack.c.b16 %v907, %v902
        %v1233 = vpack.c.b16 %v913, %v908
        %v1234 = vpack.c.b16 %v914, %v909
        %v1235 = vpack.c.b16 %v915, %v910
        %v1236 = vpack.c.b16 %v916, %v911
        %v1237 = vpack.c.b16 %v917, %v912
        %v1238 = vpack.c.b16 %v923, %v918
        %v1239 = vpack.c.b16 %v924, %v919
        %v1240 = vpack.c.b16 %v925, %v920
        %v1241 = vpack.c.b16 %v926, %v921
        %v1242 = vpack.c.b16 %v927, %v922
        %v1243 = vpack.c.b16 %v933, %v928
        %v1244 = vpack.c.b16 %v934, %v929
        %v1245 = vpack.c.b16 %v935, %v930
        %v1246 = vpack.c.b16 %v936, %v931
        %v1247 = vpack.c.b16 %v937, %v932
        %v1248 = vpack.c.b16 %v943, %v938
        %v1249 = vpack.c.b16 %v944, %v939
        %v1250 = vpack.c.b16 %v945, %v940
        %v1251 = vpack.c.b16 %v946, %v941
        %v1252 = vpack.c.b16 %v947, %v942
        %v1253 = vpack.c.b16 %v953, %v948
        %v1254 = vpack.c.b16 %v954, %v949
        %v1255 = vpack.c.b16 %v955, %v950
        %v1256 = vpack.c.b16 %v956, %v951
        %v1257 = vpack.c.b16 %v957, %v952
        %v1258 = vpack.c.b16 %v963, %v958
        %v1259 = vpack.c.b16 %v964, %v959
        %v1260 = vpack.c.b16 %v965, %v960
        %v1261 = vpack.c.b16 %v966, %v961
        %v1262 = vpack.c.b16 %v967, %v962
        %v1263 = vpack.c.b16 %v973, %v968
        %v1264 = vpack.c.b16 %v974, %v969
        %v1265 = vpack.c.b16 %v975, %v970
        %v1266 = vpack.c.b16 %v976, %v971
        %v1267 = vpack.c.b16 %v977, %v972
        %v1268 = vpack.c.b16 %v983, %v978
        %v1269 = vpack.c.b16 %v984, %v979
        %v1270 = vpack.c.b16 %v985, %v980
        %v1271 = vpack.c.b16 %v986, %v981
        %v1272 = vpack.c.b16 %v987, %v982
        %v1273 = vpack.c.b16 %v993, %v988
        %v1274 = vpack.c.b16 %v994, %v989
        %v1275 = vpack.c.b16 %v995, %v990
        %v1276 = vpack.c.b16 %v996, %v991
        %v1277 = vpack.c.b16 %v997, %v992
        %v1278 = vpack.c.b16 %v1003, %v998
        %v1279 = vpack.c.b16 %v1004, %v999
        %v1280 = vpack.c.b16 %v1005, %v1000
        %v1281 = vpack.c.b16 %v1006, %v1001
        %v1282 = vpack.c.b16 %v1007, %v1002
        %v1283 = vpack.c.b16 %v1013, %v1008
        %v1284 = vpack.c.b16 %v1014, %v1009
        %v1285 = vpack.c.b16 %v1015, %v1010
        %v1286 = vpack.c.b16 %v1016, %v1011
        %v1287 = vpack.c.b16 %v1017, %v1012
        %v1288 = vpack.c.b16 %v1023, %v1018
        %v1289 = vpack.c.b16 %v1024, %v1019
        %v1290 = vpack.c.b16 %v1025, %v1020
        %v1291 = vpack.c.b16 %v1026, %v1021
        %v1292 = vpack.c.b16 %v1027, %v1022
        %v1293 = vpack.c.b16 %v1033, %v1028
        %v1294 = vpack.c.b16 %v1034, %v1029
        %v1295 = vpack.c.b16 %v1035, %v1030
        %v1296 = vpack.c.b16 %v1036, %v1031
        %v1297 = vpack.c.b16 %v1037, %v1032
        %v1298 = vpack.c.b16 %v1043, %v1038
        %v1299 = vpack.c.b16 %v1044, %v1039
        %v1300 = vpack.c.b16 %v1045, %v1040
        %v1301 = vpack.c.b16 %v1046, %v1041
        %v1302 = vpack.c.b16 %v1047, %v1042
        %v1303 = vpack.c.b16 %v1053, %v1048
        %v1304 = vpack.c.b16 %v1054, %v1049
        %v1305 = vpack.c.b16 %v1055, %v1050
        %v1306 = vpack.c.b16 %v1056, %v1051
        %v1307 = vpack.c.b16 %v1057, %v1052
        %v1308 = vpack.c.b16 %v1063, %v1058
        %v1309 = vpack.c.b16 %v1064, %v1059
        %v1310 = vpack.c.b16 %v1065, %v1060
        %v1311 = vpack.c.b16 %v1066, %v1061
        %v1312 = vpack.c.b16 %v1067, %v1062
        %v1313 = vpack.c.b16 %v1073, %v1068
        %v1314 = vpack.c.b16 %v1074, %v1069
        %v1315 = vpack.c.b16 %v1075, %v1070
        %v1316 = vpack.c.b16 %v1076, %v1071
        %v1317 = vpack.c.b16 %v1077, %v1072
        %v1318 = vpack.c.b16 %v1083, %v1078
        %v1319 = vpack.c.b16 %v1084, %v1079
        %v1320 = vpack.c.b16 %v1085, %v1080
        %v1321 = vpack.c.b16 %v1086, %v1081
        %v1322 = vpack.c.b16 %v1087, %v1082
        %v1323 = vpack.c.b16 %v1093, %v1088
        %v1324 = vpack.c.b16 %v1094, %v1089
        %v1325 = vpack.c.b16 %v1095, %v1090
        %v1326 = vpack.c.b16 %v1096, %v1091
        %v1327 = vpack.c.b16 %v1097, %v1092
        %v1328 = vpack.c.b16 %v1103, %v1098
        %v1329 = vpack.c.b16 %v1104, %v1099
        %v1330 = vpack.c.b16 %v1105, %v1100
        %v1331 = vpack.c.b16 %v1106, %v1101
        %v1332 = vpack.c.b16 %v1107, %v1102
        %v1333 = vpack.c.b16 %v1113, %v1108
        %v1334 = vpack.c.b16 %v1114, %v1109
        %v1335 = vpack.c.b16 %v1115, %v1110
        %v1336 = vpack.c.b16 %v1116, %v1111
        %v1337 = vpack.c.b16 %v1117, %v1112
        %v1338 = vpack.c.b16 %v1123, %v1118
        %v1339 = vpack.c.b16 %v1124, %v1119
        %v1340 = vpack.c.b16 %v1125, %v1120
        %v1341 = vpack.c.b16 %v1126, %v1121
        %v1342 = vpack.c.b16 %v1127, %v1122
        %v1343 = vpack.c.b16 %v1133, %v1128
        %v1344 = vpack.c.b16 %v1134, %v1129
        %v1345 = vpack.c.b16 %v1135, %v1130
        %v1346 = vpack.c.b16 %v1136, %v1131
        %v1347 = vpack.c.b16 %v1137, %v1132
        %v1348 = vpack.c.b16 %v1143, %v1138
        %v1349 = vpack.c.b16 %v1144, %v1139
        %v1350 = vpack.c.b16 %v1145, %v1140
        %v1351 = vpack.c.b16 %v1146, %v1141
        %v1352 = vpack.c.b16 %v1147, %v1142
        %v1353 = vpack.c.b16 %v1153, %v1148
        %v1354 = vpack.c.b16 %v1154, %v1149
        %v1355 = vpack.c.b16 %v1155, %v1150
        %v1356 = vpack.c.b16 %v1156, %v1151
        %v1357 = vpack.c.b16 %v1157, %v1152
        %v1358 = vpack.c.b16 %v1163, %v1158
        %v1359 = vpack.c.b16 %v1164, %v1159
        %v1360 = vpack.c.b16 %v1165, %v1160
        %v1361 = vpack.c.b16 %v1166, %v1161
        %v1362 = vpack.c.b16 %v1167, %v1162
        %v1363 = vpack.c.b16 %v1173, %v1168
        %v1364 = vpack.c.b16 %v1174, %v1169
        %v1365 = vpack.c.b16 %v1175, %v1170
        %v1366 = vpack.c.b16 %v1176, %v1171
        %v1367 = vpack.c.b16 %v1177, %v1172
        %v1368 = vpack.c.b16 %v1183, %v1178
        %v1369 = vpack.c.b16 %v1184, %v1179
        %v1370 = vpack.c.b16 %v1185, %v1180
        %v1371 = vpack.c.b16 %v1186, %v1181
        %v1372 = vpack.c.b16 %v1187, %v1182
        %v1373 = vpack.c.b16 %v1193, %v1188
        %v1374 = vpack.c.b16 %v1194, %v1189
        %v1375 = vpack.c.b16 %v1195, %v1190
        %v1376 = vpack.c.b16 %v1196, %v1191
        %v1377 = vpack.c.b16 %v1197, %v1192
        %v1378 = vpack.c.b16 %v1203, %v1198
        %v1379 = vpack.c.b16 %v1204, %v1199
        %v1380 = vpack.c.b16 %v1205, %v1200
        %v1381 = vpack.c.b16 %v1206, %v1201
        %v1382 = vpack.c.b16 %v1207, %v1202
        %v1383 = vpack.c.b16 %v1213, %v1208
        %v1384 = vpack.c.b16 %v1214, %v1209
        %v1385 = vpack.c.b16 %v1215, %v1210
        %v1386 = vpack.c.b16 %v1216, %v1211
        %v1387 = vpack.c.b16 %v1217, %v1212
        %vm1558 = vcmask 261120
        %v1560 = vsel %vm1558, %v606, 0
        %v1563 = vsel %vm1558, %v611, 0
        %v1566 = vsel %vm1558, %v616, 0
        %v1569 = vsel %vm1558, %v621, 0
        %v1572 = vsel %vm1558, %v626, 0
        %v1575 = vsel %vm1558, %v631, 0
        %v1578 = vsel %vm1558, %v636, 0
        %v1581 = vsel %vm1558, %v641, 0
        %1583 = vmatprep.subr.bf16.mxu0 %v1219
        %1584 = vmatpush1.bf16.msra.mxu0 %v1218
        %1585 = vmatprep.subr.bf16.mxu0 %v1224
        %1586 = vmatpush1.bf16.msra.mxu0 %v1223
        %1587 = vmatprep.subr.bf16.mxu0 %v1229
        %1588 = vmatpush1.bf16.msra.mxu0 %v1228
        %1589 = vmatprep.subr.bf16.mxu0 %v1234
        %1590 = vmatpush1.bf16.msra.mxu0 %v1233
        %1591 = vmatprep.subr.bf16.mxu0 %v1239
        %1592 = vmatpush1.bf16.msra.mxu0 %v1238
        %1593 = vmatprep.subr.bf16.mxu0 %v1244
        %1594 = vmatpush1.bf16.msra.mxu0 %v1243
        %1595 = vmatprep.subr.bf16.mxu0 %v1249
        %1596 = vmatpush1.bf16.msra.mxu0 %v1248
        %1597 = vmatprep.subr.bf16.mxu0 %v1254
        %1598 = vmatpush1.bf16.msra.mxu0 %v1253
        %1599 = vmatprep.subr.bf16.mxu0 %v1259
        %1600 = vmatpush1.bf16.msra.mxu0 %v1258
        %1601 = vmatprep.subr.bf16.mxu0 %v1264
        %1602 = vmatpush1.bf16.msra.mxu0 %v1263
        %1603 = vmatprep.subr.bf16.mxu0 %v1269
        %1604 = vmatpush1.bf16.msra.mxu0 %v1268
        %1605 = vmatprep.subr.bf16.mxu0 %v1274
        %1606 = vmatpush1.bf16.msra.mxu0 %v1273
        %1607 = vmatprep.subr.bf16.mxu0 %v1279
        %1608 = vmatpush1.bf16.msra.mxu0 %v1278
        %1609 = vmatprep.subr.bf16.mxu0 %v1284
        %1610 = vmatpush1.bf16.msra.mxu0 %v1283
        %1611 = vmatprep.subr.bf16.mxu0 %v1289
        %1612 = vmatpush1.bf16.msra.mxu0 %v1288
        %1613 = vmatprep.subr.bf16.mxu0 %v1294
        %1614 = vmatpush1.bf16.msra.mxu0 %v1293
        %1615 = vmatprep.mubr.bf16.mxu0 %v603
        %1616 = vmatmul.mubr.bf16.gmra.mrb[0].mxu0 %v602
        %v1617 = vpop.f32.mrb[0].mxu0
        %v1618 = vadd.f32 %v452, %v1617
        %v1619 = vpop.f32.mrb[0].mxu0
        %v1620 = vadd.f32 %v456, %v1619
        %v1621 = vpop.f32.mrb[0].mxu0
        %v1622 = vadd.f32 %v452, %v1621
        %v1623 = vpop.f32.mrb[0].mxu0
        %v1624 = vadd.f32 %v456, %v1623
        %1625 = vmatprep.mubr.bf16.mxu0 %v608
        %1626 = vmatmul.mubr.bf16.gmra.mrb[0].mxu0 %v607
        %v1627 = vpop.f32.mrb[0].mxu0
        %v1628 = vadd.f32 %v452, %v1627
        %v1629 = vpop.f32.mrb[0].mxu0
        %v1630 = vadd.f32 %v456, %v1629
        %v1631 = vpop.f32.mrb[0].mxu0
        %v1632 = vadd.f32 %v452, %v1631
        %v1633 = vpop.f32.mrb[0].mxu0
        %v1634 = vadd.f32 %v456, %v1633
        %1635 = vmatprep.mubr.bf16.mxu0 %v613
        %1636 = vmatmul.mubr.bf16.gmra.mrb[0].mxu0 %v612
        %v1637 = vpop.f32.mrb[0].mxu0
        %v1638 = vadd.f32 %v452, %v1637
        %v1639 = vpop.f32.mrb[0].mxu0
        %v1640 = vadd.f32 %v456, %v1639
        %v1641 = vpop.f32.mrb[0].mxu0
        %v1642 = vadd.f32 %v452, %v1641
        %v1643 = vpop.f32.mrb[0].mxu0
        %v1644 = vadd.f32 %v456, %v1643
        %1645 = vmatprep.mubr.bf16.mxu0 %v618
        %1646 = vmatmul.mubr.bf16.gmra.mrb[0].mxu0 %v617
        %v1647 = vpop.f32.mrb[0].mxu0
        %v1648 = vadd.f32 %v452, %v1647
        %v1649 = vpop.f32.mrb[0].mxu0
        %v1650 = vadd.f32 %v456, %v1649
        %v1651 = vpop.f32.mrb[0].mxu0
        %v1652 = vadd.f32 %v452, %v1651
        %v1653 = vpop.f32.mrb[0].mxu0
        %v1654 = vadd.f32 %v456, %v1653
        %1655 = vmatprep.mubr.bf16.mxu0 %v623
        %1656 = vmatmul.mubr.bf16.gmra.mrb[0].mxu0 %v622
        %v1657 = vpop.f32.mrb[0].mxu0
        %v1658 = vadd.f32 %v452, %v1657
        %v1659 = vpop.f32.mrb[0].mxu0
        %v1660 = vadd.f32 %v456, %v1659
        %v1661 = vpop.f32.mrb[0].mxu0
        %v1662 = vadd.f32 %v452, %v1661
        %v1663 = vpop.f32.mrb[0].mxu0
        %v1664 = vadd.f32 %v456, %v1663
        %1665 = vmatprep.mubr.bf16.mxu0 %v628
        %1666 = vmatmul.mubr.bf16.gmra.mrb[0].mxu0 %v627
        %v1667 = vpop.f32.mrb[0].mxu0
        %v1668 = vadd.f32 %v452, %v1667
        %v1669 = vpop.f32.mrb[0].mxu0
        %v1670 = vadd.f32 %v456, %v1669
        %v1671 = vpop.f32.mrb[0].mxu0
        %v1672 = vadd.f32 %v452, %v1671
        %v1673 = vpop.f32.mrb[0].mxu0
        %v1674 = vadd.f32 %v456, %v1673
        %1675 = vmatprep.mubr.bf16.mxu0 %v633
        %1676 = vmatmul.mubr.bf16.gmra.mrb[0].mxu0 %v632
        %v1677 = vpop.f32.mrb[0].mxu0
        %v1678 = vadd.f32 %v452, %v1677
        %v1679 = vpop.f32.mrb[0].mxu0
        %v1680 = vadd.f32 %v456, %v1679
        %v1681 = vpop.f32.mrb[0].mxu0
        %v1682 = vadd.f32 %v452, %v1681
        %v1683 = vpop.f32.mrb[0].mxu0
        %v1684 = vadd.f32 %v456, %v1683
        %1685 = vmatprep.mubr.bf16.mxu0 %v638
        %1686 = vmatmul.mubr.bf16.gmra.mrb[0].mxu0 %v637
        %v1687 = vpop.f32.mrb[0].mxu0
        %v1688 = vadd.f32 %v452, %v1687
        %v1689 = vpop.f32.mrb[0].mxu0
        %v1690 = vadd.f32 %v456, %v1689
        %v1691 = vpop.f32.mrb[0].mxu0
        %v1692 = vadd.f32 %v452, %v1691
        %v1693 = vpop.f32.mrb[0].mxu0
        %v1694 = vadd.f32 %v456, %v1693
        %1695 = vdwg.mxu0
        %1696 = vmatprep.subr.bf16.mxu0 %v1299
        %1697 = vmatpush1.bf16.msra.mxu0 %v1298
        %1698 = vmatprep.subr.bf16.mxu0 %v1304
        %1699 = vmatpush1.bf16.msra.mxu0 %v1303
        %1700 = vmatprep.subr.bf16.mxu0 %v1309
        %1701 = vmatpush1.bf16.msra.mxu0 %v1308
        %1702 = vmatprep.subr.bf16.mxu0 %v1314
        %1703 = vmatpush1.bf16.msra.mxu0 %v1313
        %1704 = vmatprep.subr.bf16.mxu0 %v1319
        %1705 = vmatpush1.bf16.msra.mxu0 %v1318
        %1706 = vmatprep.subr.bf16.mxu0 %v1324
        %1707 = vmatpush1.bf16.msra.mxu0 %v1323
        %1708 = vmatprep.subr.bf16.mxu0 %v1329
        %1709 = vmatpush1.bf16.msra.mxu0 %v1328
        %1710 = vmatprep.subr.bf16.mxu0 %v1334
        %1711 = vmatpush1.bf16.msra.mxu0 %v1333
        %1712 = vmatprep.subr.bf16.mxu0 %v1339
        %1713 = vmatpush1.bf16.msra.mxu0 %v1338
        %1714 = vmatprep.subr.bf16.mxu0 %v1344
        %1715 = vmatpush1.bf16.msra.mxu0 %v1343
        %1716 = vmatprep.subr.bf16.mxu0 %v1349
        %1717 = vmatpush1.bf16.msra.mxu0 %v1348
        %1718 = vmatprep.subr.bf16.mxu0 %v1354
        %1719 = vmatpush1.bf16.msra.mxu0 %v1353
        %1720 = vmatprep.subr.bf16.mxu0 %v1359
        %1721 = vmatpush1.bf16.msra.mxu0 %v1358
        %1722 = vmatprep.subr.bf16.mxu0 %v1364
        %1723 = vmatpush1.bf16.msra.mxu0 %v1363
        %1724 = vmatprep.subr.bf16.mxu0 %v1369
        %1725 = vmatpush1.bf16.msra.mxu0 %v1368
        %1726 = vmatprep.subr.bf16.mxu0 %v1374
        %1727 = vmatpush1.bf16.msra.mxu0 %v1373
        %1728 = vmatprep.mubr.bf16.mxu0 %v605
        %1729 = vmatmul.mubr.bf16.gmra.mrb[0].mxu0 %v604
        %v1730 = vpop.f32.mrb[0].mxu0
        %v1731 = vadd.f32 %v1618, %v1730
        %v1732 = vpop.f32.mrb[0].mxu0
        %v1733 = vadd.f32 %v1620, %v1732
        %v1734 = vpop.f32.mrb[0].mxu0
        %v1735 = vadd.f32 %v1622, %v1734
        %v1736 = vpop.f32.mrb[0].mxu0
        %v1737 = vadd.f32 %v1624, %v1736
        %1738 = vmatprep.mubr.bf16.mxu0 %v610
        %1739 = vmatmul.mubr.bf16.gmra.mrb[0].mxu0 %v609
        %v1740 = vpop.f32.mrb[0].mxu0
        %v1741 = vadd.f32 %v1628, %v1740
        %v1742 = vpop.f32.mrb[0].mxu0
        %v1743 = vadd.f32 %v1630, %v1742
        %v1744 = vpop.f32.mrb[0].mxu0
        %v1745 = vadd.f32 %v1632, %v1744
        %v1746 = vpop.f32.mrb[0].mxu0
        %v1747 = vadd.f32 %v1634, %v1746
        %1748 = vmatprep.mubr.bf16.mxu0 %v615
        %1749 = vmatmul.mubr.bf16.gmra.mrb[0].mxu0 %v614
        %v1750 = vpop.f32.mrb[0].mxu0
        %v1751 = vadd.f32 %v1638, %v1750
        %v1752 = vpop.f32.mrb[0].mxu0
        %v1753 = vadd.f32 %v1640, %v1752
        %v1754 = vpop.f32.mrb[0].mxu0
        %v1755 = vadd.f32 %v1642, %v1754
        %v1756 = vpop.f32.mrb[0].mxu0
        %v1757 = vadd.f32 %v1644, %v1756
        %1758 = vmatprep.mubr.bf16.mxu0 %v620
        %1759 = vmatmul.mubr.bf16.gmra.mrb[0].mxu0 %v619
        %v1760 = vpop.f32.mrb[0].mxu0
        %v1761 = vadd.f32 %v1648, %v1760
        %v1762 = vpop.f32.mrb[0].mxu0
        %v1763 = vadd.f32 %v1650, %v1762
        %v1764 = vpop.f32.mrb[0].mxu0
        %v1765 = vadd.f32 %v1652, %v1764
        %v1766 = vpop.f32.mrb[0].mxu0
        %v1767 = vadd.f32 %v1654, %v1766
        %1768 = vmatprep.mubr.bf16.mxu0 %v625
        %1769 = vmatmul.mubr.bf16.gmra.mrb[0].mxu0 %v624
        %v1770 = vpop.f32.mrb[0].mxu0
        %v1771 = vadd.f32 %v1658, %v1770
        %v1772 = vpop.f32.mrb[0].mxu0
        %v1773 = vadd.f32 %v1660, %v1772
        %v1774 = vpop.f32.mrb[0].mxu0
        %v1775 = vadd.f32 %v1662, %v1774
        %v1776 = vpop.f32.mrb[0].mxu0
        %v1777 = vadd.f32 %v1664, %v1776
        %1778 = vmatprep.mubr.bf16.mxu0 %v630
        %1779 = vmatmul.mubr.bf16.gmra.mrb[0].mxu0 %v629
        %v1780 = vpop.f32.mrb[0].mxu0
        %v1781 = vadd.f32 %v1668, %v1780
        %v1782 = vpop.f32.mrb[0].mxu0
        %v1783 = vadd.f32 %v1670, %v1782
        %v1784 = vpop.f32.mrb[0].mxu0
        %v1785 = vadd.f32 %v1672, %v1784
        %v1786 = vpop.f32.mrb[0].mxu0
        %v1787 = vadd.f32 %v1674, %v1786
        %1788 = vmatprep.mubr.bf16.mxu0 %v635
        %1789 = vmatmul.mubr.bf16.gmra.mrb[0].mxu0 %v634
        %v1790 = vpop.f32.mrb[0].mxu0
        %v1791 = vadd.f32 %v1678, %v1790
        %v1792 = vpop.f32.mrb[0].mxu0
        %v1793 = vadd.f32 %v1680, %v1792
        %v1794 = vpop.f32.mrb[0].mxu0
        %v1795 = vadd.f32 %v1682, %v1794
        %v1796 = vpop.f32.mrb[0].mxu0
        %v1797 = vadd.f32 %v1684, %v1796
        %1798 = vmatprep.mubr.bf16.mxu0 %v640
        %1799 = vmatmul.mubr.bf16.gmra.mrb[0].mxu0 %v639
        %v1800 = vpop.f32.mrb[0].mxu0
        %v1801 = vadd.f32 %v1688, %v1800
        %v1802 = vpop.f32.mrb[0].mxu0
        %v1803 = vadd.f32 %v1690, %v1802
        %v1804 = vpop.f32.mrb[0].mxu0
        %v1805 = vadd.f32 %v1692, %v1804
        %v1806 = vpop.f32.mrb[0].mxu0
        %v1807 = vadd.f32 %v1694, %v1806
        %1808 = vdwg.mxu0
        %1809 = vmatprep.subr.bf16.mxu0 %v1379
        %1810 = vmatpush1.bf16.msra.mxu0 %v1378
        %1811 = vmatprep.subr.bf16.mxu0 %v1384
        %1812 = vmatpush1.bf16.msra.mxu0 %v1383
        %1813 = vmatprep.subr.bf16.mxu0 0
        %1814 = vmatpush1.bf16.msra.mxu0 0
        %1815 = vmatprep.subr.bf16.mxu0 0
        %1816 = vmatpush1.bf16.msra.mxu0 0
        %1817 = vmatprep.subr.bf16.mxu0 0
        %1818 = vmatpush1.bf16.msra.mxu0 0
        %1819 = vmatprep.subr.bf16.mxu0 0
        %1820 = vmatpush1.bf16.msra.mxu0 0
        %1821 = vmatprep.subr.bf16.mxu0 0
        %1822 = vmatpush1.bf16.msra.mxu0 0
        %1823 = vmatprep.subr.bf16.mxu0 0
        %1824 = vmatpush1.bf16.msra.mxu0 0
        %1825 = vmatprep.subr.bf16.mxu0 0
        %1826 = vmatpush1.bf16.msra.mxu0 0
        %1827 = vmatprep.subr.bf16.mxu0 0
        %1828 = vmatpush1.bf16.msra.mxu0 0
        %1829 = vmatprep.subr.bf16.mxu0 0
        %1830 = vmatpush1.bf16.msra.mxu0 0
        %1831 = vmatprep.subr.bf16.mxu0 0
        %1832 = vmatpush1.bf16.msra.mxu0 0
        %1833 = vmatprep.subr.bf16.mxu0 0
        %1834 = vmatpush1.bf16.msra.mxu0 0
        %1835 = vmatprep.subr.bf16.mxu0 0
        %1836 = vmatpush1.bf16.msra.mxu0 0
        %1837 = vmatprep.subr.bf16.mxu0 0
        %1838 = vmatpush1.bf16.msra.mxu0 0
        %1839 = vmatprep.subr.bf16.mxu0 0
        %1840 = vmatpush1.bf16.msra.mxu0 0
        %1841 = vmatprep.mubr.bf16.mxu0 0
        %1842 = vmatmul.mubr.bf16.gmra.mrb[0].mxu0 %v1560
        %v1843 = vpop.f32.mrb[0].mxu0
        %v1844 = vadd.f32 %v1731, %v1843
        %v1845 = vpop.f32.mrb[0].mxu0
        %v1846 = vadd.f32 %v1733, %v1845
        %v1847 = vpop.f32.mrb[0].mxu0
        %v1848 = vadd.f32 %v1735, %v1847
        %v1849 = vpop.f32.mrb[0].mxu0
        %v1850 = vadd.f32 %v1737, %v1849
        %1851 = vmatprep.mubr.bf16.mxu0 0
        %1852 = vmatmul.mubr.bf16.gmra.mrb[0].mxu0 %v1563
        %v1853 = vpop.f32.mrb[0].mxu0
        %v1854 = vadd.f32 %v1741, %v1853
        %v1855 = vpop.f32.mrb[0].mxu0
        %v1856 = vadd.f32 %v1743, %v1855
        %v1857 = vpop.f32.mrb[0].mxu0
        %v1858 = vadd.f32 %v1745, %v1857
        %v1859 = vpop.f32.mrb[0].mxu0
        %v1860 = vadd.f32 %v1747, %v1859
        %1861 = vmatprep.mubr.bf16.mxu0 0
        %1862 = vmatmul.mubr.bf16.gmra.mrb[0].mxu0 %v1566
        %v1863 = vpop.f32.mrb[0].mxu0
        %v1864 = vadd.f32 %v1751, %v1863
        %v1865 = vpop.f32.mrb[0].mxu0
        %v1866 = vadd.f32 %v1753, %v1865
        %v1867 = vpop.f32.mrb[0].mxu0
        %v1868 = vadd.f32 %v1755, %v1867
        %v1869 = vpop.f32.mrb[0].mxu0
        %v1870 = vadd.f32 %v1757, %v1869
        %1871 = vmatprep.mubr.bf16.mxu0 0
        %1872 = vmatmul.mubr.bf16.gmra.mrb[0].mxu0 %v1569
        %v1873 = vpop.f32.mrb[0].mxu0
        %v1874 = vadd.f32 %v1761, %v1873
        %v1875 = vpop.f32.mrb[0].mxu0
        %v1876 = vadd.f32 %v1763, %v1875
        %v1877 = vpop.f32.mrb[0].mxu0
        %v1878 = vadd.f32 %v1765, %v1877
        %v1879 = vpop.f32.mrb[0].mxu0
        %v1880 = vadd.f32 %v1767, %v1879
        %1881 = vmatprep.mubr.bf16.mxu0 0
        %1882 = vmatmul.mubr.bf16.gmra.mrb[0].mxu0 %v1572
        %v1883 = vpop.f32.mrb[0].mxu0
        %v1884 = vadd.f32 %v1771, %v1883
        %v1885 = vpop.f32.mrb[0].mxu0
        %v1886 = vadd.f32 %v1773, %v1885
        %v1887 = vpop.f32.mrb[0].mxu0
        %v1888 = vadd.f32 %v1775, %v1887
        %v1889 = vpop.f32.mrb[0].mxu0
        %v1890 = vadd.f32 %v1777, %v1889
        %1891 = vmatprep.mubr.bf16.mxu0 0
        %1892 = vmatmul.mubr.bf16.gmra.mrb[0].mxu0 %v1575
        %v1893 = vpop.f32.mrb[0].mxu0
        %v1894 = vadd.f32 %v1781, %v1893
        %v1895 = vpop.f32.mrb[0].mxu0
        %v1896 = vadd.f32 %v1783, %v1895
        %v1897 = vpop.f32.mrb[0].mxu0
        %v1898 = vadd.f32 %v1785, %v1897
        %v1899 = vpop.f32.mrb[0].mxu0
        %v1900 = vadd.f32 %v1787, %v1899
        %1901 = vmatprep.mubr.bf16.mxu0 0
        %1902 = vmatmul.mubr.bf16.gmra.mrb[0].mxu0 %v1578
        %v1903 = vpop.f32.mrb[0].mxu0
        %v1904 = vadd.f32 %v1791, %v1903
        %v1905 = vpop.f32.mrb[0].mxu0
        %v1906 = vadd.f32 %v1793, %v1905
        %v1907 = vpop.f32.mrb[0].mxu0
        %v1908 = vadd.f32 %v1795, %v1907
        %v1909 = vpop.f32.mrb[0].mxu0
        %v1910 = vadd.f32 %v1797, %v1909
        %1911 = vmatprep.mubr.bf16.mxu0 0
        %1912 = vmatmul.mubr.bf16.gmra.mrb[0].mxu0 %v1581
        %v1913 = vpop.f32.mrb[0].mxu0
        %v1914 = vadd.f32 %v1801, %v1913
        %v1915 = vpop.f32.mrb[0].mxu0
        %v1916 = vadd.f32 %v1803, %v1915
        %v1917 = vpop.f32.mrb[0].mxu0
        %v1918 = vadd.f32 %v1805, %v1917
        %v1919 = vpop.f32.mrb[0].mxu0
        %v1920 = vadd.f32 %v1807, %v1919
        %1921 = vdwg.mxu0
        %1922 = vmatprep.subr.bf16.mxu0 %v1221
        %1923 = vmatpush1.bf16.msra.mxu0 %v1220
        %1924 = vmatprep.subr.bf16.mxu0 %v1226
        %1925 = vmatpush1.bf16.msra.mxu0 %v1225
        %1926 = vmatprep.subr.bf16.mxu0 %v1231
        %1927 = vmatpush1.bf16.msra.mxu0 %v1230
        %1928 = vmatprep.subr.bf16.mxu0 %v1236
        %1929 = vmatpush1.bf16.msra.mxu0 %v1235
        %1930 = vmatprep.subr.bf16.mxu0 %v1241
        %1931 = vmatpush1.bf16.msra.mxu0 %v1240
        %1932 = vmatprep.subr.bf16.mxu0 %v1246
        %1933 = vmatpush1.bf16.msra.mxu0 %v1245
        %1934 = vmatprep.subr.bf16.mxu0 %v1251
        %1935 = vmatpush1.bf16.msra.mxu0 %v1250
        %1936 = vmatprep.subr.bf16.mxu0 %v1256
        %1937 = vmatpush1.bf16.msra.mxu0 %v1255
        %1938 = vmatprep.subr.bf16.mxu0 %v1261
        %1939 = vmatpush1.bf16.msra.mxu0 %v1260
        %1940 = vmatprep.subr.bf16.mxu0 %v1266
        %1941 = vmatpush1.bf16.msra.mxu0 %v1265
        %1942 = vmatprep.subr.bf16.mxu0 %v1271
        %1943 = vmatpush1.bf16.msra.mxu0 %v1270
        %1944 = vmatprep.subr.bf16.mxu0 %v1276
        %1945 = vmatpush1.bf16.msra.mxu0 %v1275
        %1946 = vmatprep.subr.bf16.mxu0 %v1281
        %1947 = vmatpush1.bf16.msra.mxu0 %v1280
        %1948 = vmatprep.subr.bf16.mxu0 %v1286
        %1949 = vmatpush1.bf16.msra.mxu0 %v1285
        %1950 = vmatprep.subr.bf16.mxu0 %v1291
        %1951 = vmatpush1.bf16.msra.mxu0 %v1290
        %1952 = vmatprep.subr.bf16.mxu0 %v1296
        %1953 = vmatpush1.bf16.msra.mxu0 %v1295
        %1954 = vmatprep.mubr.bf16.mxu0 %v603
        %1955 = vmatmul.mubr.bf16.gmra.mrb[0].mxu0 %v602
        %v1956 = vpop.f32.mrb[0].mxu0
        %v1957 = vadd.f32 %v460, %v1956
        %v1958 = vpop.f32.mrb[0].mxu0
        %v1959 = vadd.f32 %v464, %v1958
        %v1960 = vpop.f32.mrb[0].mxu0
        %v1961 = vadd.f32 %v460, %v1960
        %v1962 = vpop.f32.mrb[0].mxu0
        %v1963 = vadd.f32 %v464, %v1962
        %1964 = vmatprep.mubr.bf16.mxu0 %v608
        %1965 = vmatmul.mubr.bf16.gmra.mrb[0].mxu0 %v607
        %v1966 = vpop.f32.mrb[0].mxu0
        %v1967 = vadd.f32 %v460, %v1966
        %v1968 = vpop.f32.mrb[0].mxu0
        %v1969 = vadd.f32 %v464, %v1968
        %v1970 = vpop.f32.mrb[0].mxu0
        %v1971 = vadd.f32 %v460, %v1970
        %v1972 = vpop.f32.mrb[0].mxu0
        %v1973 = vadd.f32 %v464, %v1972
        %1974 = vmatprep.mubr.bf16.mxu0 %v613
        %1975 = vmatmul.mubr.bf16.gmra.mrb[0].mxu0 %v612
        %v1976 = vpop.f32.mrb[0].mxu0
        %v1977 = vadd.f32 %v460, %v1976
        %v1978 = vpop.f32.mrb[0].mxu0
        %v1979 = vadd.f32 %v464, %v1978
        %v1980 = vpop.f32.mrb[0].mxu0
        %v1981 = vadd.f32 %v460, %v1980
        %v1982 = vpop.f32.mrb[0].mxu0
        %v1983 = vadd.f32 %v464, %v1982
        %1984 = vmatprep.mubr.bf16.mxu0 %v618
        %1985 = vmatmul.mubr.bf16.gmra.mrb[0].mxu0 %v617
        %v1986 = vpop.f32.mrb[0].mxu0
        %v1987 = vadd.f32 %v460, %v1986
        %v1988 = vpop.f32.mrb[0].mxu0
        %v1989 = vadd.f32 %v464, %v1988
        %v1990 = vpop.f32.mrb[0].mxu0
        %v1991 = vadd.f32 %v460, %v1990
        %v1992 = vpop.f32.mrb[0].mxu0
        %v1993 = vadd.f32 %v464, %v1992
        %1994 = vmatprep.mubr.bf16.mxu0 %v623
        %1995 = vmatmul.mubr.bf16.gmra.mrb[0].mxu0 %v622
        %v1996 = vpop.f32.mrb[0].mxu0
        %v1997 = vadd.f32 %v460, %v1996
        %v1998 = vpop.f32.mrb[0].mxu0
        %v1999 = vadd.f32 %v464, %v1998
        %v2000 = vpop.f32.mrb[0].mxu0
        %v2001 = vadd.f32 %v460, %v2000
        %v2002 = vpop.f32.mrb[0].mxu0
        %v2003 = vadd.f32 %v464, %v2002
        %2004 = vmatprep.mubr.bf16.mxu0 %v628
        %2005 = vmatmul.mubr.bf16.gmra.mrb[0].mxu0 %v627
        %v2006 = vpop.f32.mrb[0].mxu0
        %v2007 = vadd.f32 %v460, %v2006
        %v2008 = vpop.f32.mrb[0].mxu0
        %v2009 = vadd.f32 %v464, %v2008
        %v2010 = vpop.f32.mrb[0].mxu0
        %v2011 = vadd.f32 %v460, %v2010
        %v2012 = vpop.f32.mrb[0].mxu0
        %v2013 = vadd.f32 %v464, %v2012
        %2014 = vmatprep.mubr.bf16.mxu0 %v633
        %2015 = vmatmul.mubr.bf16.gmra.mrb[0].mxu0 %v632
        %v2016 = vpop.f32.mrb[0].mxu0
        %v2017 = vadd.f32 %v460, %v2016
        %v2018 = vpop.f32.mrb[0].mxu0
        %v2019 = vadd.f32 %v464, %v2018
        %v2020 = vpop.f32.mrb[0].mxu0
        %v2021 = vadd.f32 %v460, %v2020
        %v2022 = vpop.f32.mrb[0].mxu0
        %v2023 = vadd.f32 %v464, %v2022
        %2024 = vmatprep.mubr.bf16.mxu0 %v638
        %2025 = vmatmul.mubr.bf16.gmra.mrb[0].mxu0 %v637
        %v2026 = vpop.f32.mrb[0].mxu0
        %v2027 = vadd.f32 %v460, %v2026
        %v2028 = vpop.f32.mrb[0].mxu0
        %v2029 = vadd.f32 %v464, %v2028
        %v2030 = vpop.f32.mrb[0].mxu0
        %v2031 = vadd.f32 %v460, %v2030
        %v2032 = vpop.f32.mrb[0].mxu0
        %v2033 = vadd.f32 %v464, %v2032
        %2034 = vdwg.mxu0
        %2035 = vmatprep.subr.bf16.mxu0 %v1301
        %2036 = vmatpush1.bf16.msra.mxu0 %v1300
        %2037 = vmatprep.subr.bf16.mxu0 %v1306
        %2038 = vmatpush1.bf16.msra.mxu0 %v1305
        %2039 = vmatprep.subr.bf16.mxu0 %v1311
        %2040 = vmatpush1.bf16.msra.mxu0 %v1310
        %2041 = vmatprep.subr.bf16.mxu0 %v1316
        %2042 = vmatpush1.bf16.msra.mxu0 %v1315
        %2043 = vmatprep.subr.bf16.mxu0 %v1321
        %2044 = vmatpush1.bf16.msra.mxu0 %v1320
        %2045 = vmatprep.subr.bf16.mxu0 %v1326
        %2046 = vmatpush1.bf16.msra.mxu0 %v1325
        %2047 = vmatprep.subr.bf16.mxu0 %v1331
        %2048 = vmatpush1.bf16.msra.mxu0 %v1330
        %2049 = vmatprep.subr.bf16.mxu0 %v1336
        %2050 = vmatpush1.bf16.msra.mxu0 %v1335
        %2051 = vmatprep.subr.bf16.mxu0 %v1341
        %2052 = vmatpush1.bf16.msra.mxu0 %v1340
        %2053 = vmatprep.subr.bf16.mxu0 %v1346
        %2054 = vmatpush1.bf16.msra.mxu0 %v1345
        %2055 = vmatprep.subr.bf16.mxu0 %v1351
        %2056 = vmatpush1.bf16.msra.mxu0 %v1350
        %2057 = vmatprep.subr.bf16.mxu0 %v1356
        %2058 = vmatpush1.bf16.msra.mxu0 %v1355
        %2059 = vmatprep.subr.bf16.mxu0 %v1361
        %2060 = vmatpush1.bf16.msra.mxu0 %v1360
        %2061 = vmatprep.subr.bf16.mxu0 %v1366
        %2062 = vmatpush1.bf16.msra.mxu0 %v1365
        %2063 = vmatprep.subr.bf16.mxu0 %v1371
        %2064 = vmatpush1.bf16.msra.mxu0 %v1370
        %2065 = vmatprep.subr.bf16.mxu0 %v1376
        %2066 = vmatpush1.bf16.msra.mxu0 %v1375
        %2067 = vmatprep.mubr.bf16.mxu0 %v605
        %2068 = vmatmul.mubr.bf16.gmra.mrb[0].mxu0 %v604
        %v2069 = vpop.f32.mrb[0].mxu0
        %v2070 = vadd.f32 %v1957, %v2069
        %v2071 = vpop.f32.mrb[0].mxu0
        %v2072 = vadd.f32 %v1959, %v2071
        %v2073 = vpop.f32.mrb[0].mxu0
        %v2074 = vadd.f32 %v1961, %v2073
        %v2075 = vpop.f32.mrb[0].mxu0
        %v2076 = vadd.f32 %v1963, %v2075
        %2077 = vmatprep.mubr.bf16.mxu0 %v610
        %2078 = vmatmul.mubr.bf16.gmra.mrb[0].mxu0 %v609
        %v2079 = vpop.f32.mrb[0].mxu0
        %v2080 = vadd.f32 %v1967, %v2079
        %v2081 = vpop.f32.mrb[0].mxu0
        %v2082 = vadd.f32 %v1969, %v2081
        %v2083 = vpop.f32.mrb[0].mxu0
        %v2084 = vadd.f32 %v1971, %v2083
        %v2085 = vpop.f32.mrb[0].mxu0
        %v2086 = vadd.f32 %v1973, %v2085
        %2087 = vmatprep.mubr.bf16.mxu0 %v615
        %2088 = vmatmul.mubr.bf16.gmra.mrb[0].mxu0 %v614
        %v2089 = vpop.f32.mrb[0].mxu0
        %v2090 = vadd.f32 %v1977, %v2089
        %v2091 = vpop.f32.mrb[0].mxu0
        %v2092 = vadd.f32 %v1979, %v2091
        %v2093 = vpop.f32.mrb[0].mxu0
        %v2094 = vadd.f32 %v1981, %v2093
        %v2095 = vpop.f32.mrb[0].mxu0
        %v2096 = vadd.f32 %v1983, %v2095
        %2097 = vmatprep.mubr.bf16.mxu0 %v620
        %2098 = vmatmul.mubr.bf16.gmra.mrb[0].mxu0 %v619
        %v2099 = vpop.f32.mrb[0].mxu0
        %v2100 = vadd.f32 %v1987, %v2099
        %v2101 = vpop.f32.mrb[0].mxu0
        %v2102 = vadd.f32 %v1989, %v2101
        %v2103 = vpop.f32.mrb[0].mxu0
        %v2104 = vadd.f32 %v1991, %v2103
        %v2105 = vpop.f32.mrb[0].mxu0
        %v2106 = vadd.f32 %v1993, %v2105
        %2107 = vmatprep.mubr.bf16.mxu0 %v625
        %2108 = vmatmul.mubr.bf16.gmra.mrb[0].mxu0 %v624
        %v2109 = vpop.f32.mrb[0].mxu0
        %v2110 = vadd.f32 %v1997, %v2109
        %v2111 = vpop.f32.mrb[0].mxu0
        %v2112 = vadd.f32 %v1999, %v2111
        %v2113 = vpop.f32.mrb[0].mxu0
        %v2114 = vadd.f32 %v2001, %v2113
        %v2115 = vpop.f32.mrb[0].mxu0
        %v2116 = vadd.f32 %v2003, %v2115
        %2117 = vmatprep.mubr.bf16.mxu0 %v630
        %2118 = vmatmul.mubr.bf16.gmra.mrb[0].mxu0 %v629
        %v2119 = vpop.f32.mrb[0].mxu0
        %v2120 = vadd.f32 %v2007, %v2119
        %v2121 = vpop.f32.mrb[0].mxu0
        %v2122 = vadd.f32 %v2009, %v2121
        %v2123 = vpop.f32.mrb[0].mxu0
        %v2124 = vadd.f32 %v2011, %v2123
        %v2125 = vpop.f32.mrb[0].mxu0
        %v2126 = vadd.f32 %v2013, %v2125
        %2127 = vmatprep.mubr.bf16.mxu0 %v635
        %2128 = vmatmul.mubr.bf16.gmra.mrb[0].mxu0 %v634
        %v2129 = vpop.f32.mrb[0].mxu0
        %v2130 = vadd.f32 %v2017, %v2129
        %v2131 = vpop.f32.mrb[0].mxu0
        %v2132 = vadd.f32 %v2019, %v2131
        %v2133 = vpop.f32.mrb[0].mxu0
        %v2134 = vadd.f32 %v2021, %v2133
        %v2135 = vpop.f32.mrb[0].mxu0
        %v2136 = vadd.f32 %v2023, %v2135
        %2137 = vmatprep.mubr.bf16.mxu0 %v640
        %2138 = vmatmul.mubr.bf16.gmra.mrb[0].mxu0 %v639
        %v2139 = vpop.f32.mrb[0].mxu0
        %v2140 = vadd.f32 %v2027, %v2139
        %v2141 = vpop.f32.mrb[0].mxu0
        %v2142 = vadd.f32 %v2029, %v2141
        %v2143 = vpop.f32.mrb[0].mxu0
        %v2144 = vadd.f32 %v2031, %v2143
        %v2145 = vpop.f32.mrb[0].mxu0
        %v2146 = vadd.f32 %v2033, %v2145
        %2147 = vdwg.mxu0
        %2148 = vmatprep.subr.bf16.mxu0 %v1381
        %2149 = vmatpush1.bf16.msra.mxu0 %v1380
        %2150 = vmatprep.subr.bf16.mxu0 %v1386
        %2151 = vmatpush1.bf16.msra.mxu0 %v1385
        %2152 = vmatprep.subr.bf16.mxu0 0
        %2153 = vmatpush1.bf16.msra.mxu0 0
        %2154 = vmatprep.subr.bf16.mxu0 0
        %2155 = vmatpush1.bf16.msra.mxu0 0
        %2156 = vmatprep.subr.bf16.mxu0 0
        %2157 = vmatpush1.bf16.msra.mxu0 0
        %2158 = vmatprep.subr.bf16.mxu0 0
        %2159 = vmatpush1.bf16.msra.mxu0 0
        %2160 = vmatprep.subr.bf16.mxu0 0
        %2161 = vmatpush1.bf16.msra.mxu0 0
        %2162 = vmatprep.subr.bf16.mxu0 0
        %2163 = vmatpush1.bf16.msra.mxu0 0
        %2164 = vmatprep.subr.bf16.mxu0 0
        %2165 = vmatpush1.bf16.msra.mxu0 0
        %2166 = vmatprep.subr.bf16.mxu0 0
        %2167 = vmatpush1.bf16.msra.mxu0 0
        %2168 = vmatprep.subr.bf16.mxu0 0
        %2169 = vmatpush1.bf16.msra.mxu0 0
        %2170 = vmatprep.subr.bf16.mxu0 0
        %2171 = vmatpush1.bf16.msra.mxu0 0
        %2172 = vmatprep.subr.bf16.mxu0 0
        %2173 = vmatpush1.bf16.msra.mxu0 0
        %2174 = vmatprep.subr.bf16.mxu0 0
        %2175 = vmatpush1.bf16.msra.mxu0 0
        %2176 = vmatprep.subr.bf16.mxu0 0
        %2177 = vmatpush1.bf16.msra.mxu0 0
        %2178 = vmatprep.subr.bf16.mxu0 0
        %2179 = vmatpush1.bf16.msra.mxu0 0
        %2180 = vmatprep.mubr.bf16.mxu0 0
        %2181 = vmatmul.mubr.bf16.gmra.mrb[0].mxu0 %v1560
        %v2182 = vpop.f32.mrb[0].mxu0
        %v2183 = vadd.f32 %v2070, %v2182
        %v2184 = vpop.f32.mrb[0].mxu0
        %v2185 = vadd.f32 %v2072, %v2184
        %v2186 = vpop.f32.mrb[0].mxu0
        %v2187 = vadd.f32 %v2074, %v2186
        %v2188 = vpop.f32.mrb[0].mxu0
        %v2189 = vadd.f32 %v2076, %v2188
        %2190 = vmatprep.mubr.bf16.mxu0 0
        %2191 = vmatmul.mubr.bf16.gmra.mrb[0].mxu0 %v1563
        %v2192 = vpop.f32.mrb[0].mxu0
        %v2193 = vadd.f32 %v2080, %v2192
        %v2194 = vpop.f32.mrb[0].mxu0
        %v2195 = vadd.f32 %v2082, %v2194
        %v2196 = vpop.f32.mrb[0].mxu0
        %v2197 = vadd.f32 %v2084, %v2196
        %v2198 = vpop.f32.mrb[0].mxu0
        %v2199 = vadd.f32 %v2086, %v2198
        %2200 = vmatprep.mubr.bf16.mxu0 0
        %2201 = vmatmul.mubr.bf16.gmra.mrb[0].mxu0 %v1566
        %v2202 = vpop.f32.mrb[0].mxu0
        %v2203 = vadd.f32 %v2090, %v2202
        %v2204 = vpop.f32.mrb[0].mxu0
        %v2205 = vadd.f32 %v2092, %v2204
        %v2206 = vpop.f32.mrb[0].mxu0
        %v2207 = vadd.f32 %v2094, %v2206
        %v2208 = vpop.f32.mrb[0].mxu0
        %v2209 = vadd.f32 %v2096, %v2208
        %2210 = vmatprep.mubr.bf16.mxu0 0
        %2211 = vmatmul.mubr.bf16.gmra.mrb[0].mxu0 %v1569
        %v2212 = vpop.f32.mrb[0].mxu0
        %v2213 = vadd.f32 %v2100, %v2212
        %v2214 = vpop.f32.mrb[0].mxu0
        %v2215 = vadd.f32 %v2102, %v2214
        %v2216 = vpop.f32.mrb[0].mxu0
        %v2217 = vadd.f32 %v2104, %v2216
        %v2218 = vpop.f32.mrb[0].mxu0
        %v2219 = vadd.f32 %v2106, %v2218
        %2220 = vmatprep.mubr.bf16.mxu0 0
        %2221 = vmatmul.mubr.bf16.gmra.mrb[0].mxu0 %v1572
        %v2222 = vpop.f32.mrb[0].mxu0
        %v2223 = vadd.f32 %v2110, %v2222
        %v2224 = vpop.f32.mrb[0].mxu0
        %v2225 = vadd.f32 %v2112, %v2224
        %v2226 = vpop.f32.mrb[0].mxu0
        %v2227 = vadd.f32 %v2114, %v2226
        %v2228 = vpop.f32.mrb[0].mxu0
        %v2229 = vadd.f32 %v2116, %v2228
        %2230 = vmatprep.mubr.bf16.mxu0 0
        %2231 = vmatmul.mubr.bf16.gmra.mrb[0].mxu0 %v1575
        %v2232 = vpop.f32.mrb[0].mxu0
        %v2233 = vadd.f32 %v2120, %v2232
        %v2234 = vpop.f32.mrb[0].mxu0
        %v2235 = vadd.f32 %v2122, %v2234
        %v2236 = vpop.f32.mrb[0].mxu0
        %v2237 = vadd.f32 %v2124, %v2236
        %v2238 = vpop.f32.mrb[0].mxu0
        %v2239 = vadd.f32 %v2126, %v2238
        %2240 = vmatprep.mubr.bf16.mxu0 0
        %2241 = vmatmul.mubr.bf16.gmra.mrb[0].mxu0 %v1578
        %v2242 = vpop.f32.mrb[0].mxu0
        %v2243 = vadd.f32 %v2130, %v2242
        %v2244 = vpop.f32.mrb[0].mxu0
        %v2245 = vadd.f32 %v2132, %v2244
        %v2246 = vpop.f32.mrb[0].mxu0
        %v2247 = vadd.f32 %v2134, %v2246
        %v2248 = vpop.f32.mrb[0].mxu0
        %v2249 = vadd.f32 %v2136, %v2248
        %2250 = vmatprep.mubr.bf16.mxu0 0
        %2251 = vmatmul.mubr.bf16.gmra.mrb[0].mxu0 %v1581
        %v2252 = vpop.f32.mrb[0].mxu0
        %v2253 = vadd.f32 %v2140, %v2252
        %v2254 = vpop.f32.mrb[0].mxu0
        %v2255 = vadd.f32 %v2142, %v2254
        %v2256 = vpop.f32.mrb[0].mxu0
        %v2257 = vadd.f32 %v2144, %v2256
        %v2258 = vpop.f32.mrb[0].mxu0
        %v2259 = vadd.f32 %v2146, %v2258
        %2260 = vdwg.mxu0
        %2261 = vmatprep.subr.bf16.mxu0 0
        %2262 = vmatpush1.bf16.msra.mxu0 %v1222
        %2263 = vmatprep.subr.bf16.mxu0 0
        %2264 = vmatpush1.bf16.msra.mxu0 %v1227
        %2265 = vmatprep.subr.bf16.mxu0 0
        %2266 = vmatpush1.bf16.msra.mxu0 %v1232
        %2267 = vmatprep.subr.bf16.mxu0 0
        %2268 = vmatpush1.bf16.msra.mxu0 %v1237
        %2269 = vmatprep.subr.bf16.mxu0 0
        %2270 = vmatpush1.bf16.msra.mxu0 %v1242
        %2271 = vmatprep.subr.bf16.mxu0 0
        %2272 = vmatpush1.bf16.msra.mxu0 %v1247
        %2273 = vmatprep.subr.bf16.mxu0 0
        %2274 = vmatpush1.bf16.msra.mxu0 %v1252
        %2275 = vmatprep.subr.bf16.mxu0 0
        %2276 = vmatpush1.bf16.msra.mxu0 %v1257
        %2277 = vmatprep.subr.bf16.mxu0 0
        %2278 = vmatpush1.bf16.msra.mxu0 %v1262
        %2279 = vmatprep.subr.bf16.mxu0 0
        %2280 = vmatpush1.bf16.msra.mxu0 %v1267
        %2281 = vmatprep.subr.bf16.mxu0 0
        %2282 = vmatpush1.bf16.msra.mxu0 %v1272
        %2283 = vmatprep.subr.bf16.mxu0 0
        %2284 = vmatpush1.bf16.msra.mxu0 %v1277
        %2285 = vmatprep.subr.bf16.mxu0 0
        %2286 = vmatpush1.bf16.msra.mxu0 %v1282
        %2287 = vmatprep.subr.bf16.mxu0 0
        %2288 = vmatpush1.bf16.msra.mxu0 %v1287
        %2289 = vmatprep.subr.bf16.mxu0 0
        %2290 = vmatpush1.bf16.msra.mxu0 %v1292
        %2291 = vmatprep.subr.bf16.mxu0 0
        %2292 = vmatpush1.bf16.msra.mxu0 %v1297
        %2293 = vmatprep.mubr.bf16.mxu0 %v603
        %2294 = vmatmul.mubr.bf16.gmra.mrb[0].mxu0 %v602
        %v2295 = vpop.f32.mrb[0].mxu0
        %v2296 = vadd.f32 %v468, %v2295
        %v2297 = vpop.f32.mrb[0].mxu0
        %v2298 = vpop.f32.mrb[0].mxu0
        %v2299 = vadd.f32 %v468, %v2298
        %v2300 = vpop.f32.mrb[0].mxu0
        %2301 = vmatprep.mubr.bf16.mxu0 %v608
        %2302 = vmatmul.mubr.bf16.gmra.mrb[0].mxu0 %v607
        %v2303 = vpop.f32.mrb[0].mxu0
        %v2304 = vadd.f32 %v468, %v2303
        %v2305 = vpop.f32.mrb[0].mxu0
        %v2306 = vpop.f32.mrb[0].mxu0
        %v2307 = vadd.f32 %v468, %v2306
        %v2308 = vpop.f32.mrb[0].mxu0
        %2309 = vmatprep.mubr.bf16.mxu0 %v613
        %2310 = vmatmul.mubr.bf16.gmra.mrb[0].mxu0 %v612
        %v2311 = vpop.f32.mrb[0].mxu0
        %v2312 = vadd.f32 %v468, %v2311
        %v2313 = vpop.f32.mrb[0].mxu0
        %v2314 = vpop.f32.mrb[0].mxu0
        %v2315 = vadd.f32 %v468, %v2314
        %v2316 = vpop.f32.mrb[0].mxu0
        %2317 = vmatprep.mubr.bf16.mxu0 %v618
        %2318 = vmatmul.mubr.bf16.gmra.mrb[0].mxu0 %v617
        %v2319 = vpop.f32.mrb[0].mxu0
        %v2320 = vadd.f32 %v468, %v2319
        %v2321 = vpop.f32.mrb[0].mxu0
        %v2322 = vpop.f32.mrb[0].mxu0
        %v2323 = vadd.f32 %v468, %v2322
        %v2324 = vpop.f32.mrb[0].mxu0
        %2325 = vmatprep.mubr.bf16.mxu0 %v623
        %2326 = vmatmul.mubr.bf16.gmra.mrb[0].mxu0 %v622
        %v2327 = vpop.f32.mrb[0].mxu0
        %v2328 = vadd.f32 %v468, %v2327
        %v2329 = vpop.f32.mrb[0].mxu0
        %v2330 = vpop.f32.mrb[0].mxu0
        %v2331 = vadd.f32 %v468, %v2330
        %v2332 = vpop.f32.mrb[0].mxu0
        %2333 = vmatprep.mubr.bf16.mxu0 %v628
        %2334 = vmatmul.mubr.bf16.gmra.mrb[0].mxu0 %v627
        %v2335 = vpop.f32.mrb[0].mxu0
        %v2336 = vadd.f32 %v468, %v2335
        %v2337 = vpop.f32.mrb[0].mxu0
        %v2338 = vpop.f32.mrb[0].mxu0
        %v2339 = vadd.f32 %v468, %v2338
        %v2340 = vpop.f32.mrb[0].mxu0
        %2341 = vmatprep.mubr.bf16.mxu0 %v633
        %2342 = vmatmul.mubr.bf16.gmra.mrb[0].mxu0 %v632
        %v2343 = vpop.f32.mrb[0].mxu0
        %v2344 = vadd.f32 %v468, %v2343
        %v2345 = vpop.f32.mrb[0].mxu0
        %v2346 = vpop.f32.mrb[0].mxu0
        %v2347 = vadd.f32 %v468, %v2346
        %v2348 = vpop.f32.mrb[0].mxu0
        %2349 = vmatprep.mubr.bf16.mxu0 %v638
        %2350 = vmatmul.mubr.bf16.gmra.mrb[0].mxu0 %v637
        %v2351 = vpop.f32.mrb[0].mxu0
        %v2352 = vadd.f32 %v468, %v2351
        %v2353 = vpop.f32.mrb[0].mxu0
        %v2354 = vpop.f32.mrb[0].mxu0
        %v2355 = vadd.f32 %v468, %v2354
        %v2356 = vpop.f32.mrb[0].mxu0
        %2357 = vdwg.mxu0
        %2358 = vmatprep.subr.bf16.mxu0 0
        %2359 = vmatpush1.bf16.msra.mxu0 %v1302
        %2360 = vmatprep.subr.bf16.mxu0 0
        %2361 = vmatpush1.bf16.msra.mxu0 %v1307
        %2362 = vmatprep.subr.bf16.mxu0 0
        %2363 = vmatpush1.bf16.msra.mxu0 %v1312
        %2364 = vmatprep.subr.bf16.mxu0 0
        %2365 = vmatpush1.bf16.msra.mxu0 %v1317
        %2366 = vmatprep.subr.bf16.mxu0 0
        %2367 = vmatpush1.bf16.msra.mxu0 %v1322
        %2368 = vmatprep.subr.bf16.mxu0 0
        %2369 = vmatpush1.bf16.msra.mxu0 %v1327
        %2370 = vmatprep.subr.bf16.mxu0 0
        %2371 = vmatpush1.bf16.msra.mxu0 %v1332
        %2372 = vmatprep.subr.bf16.mxu0 0
        %2373 = vmatpush1.bf16.msra.mxu0 %v1337
        %2374 = vmatprep.subr.bf16.mxu0 0
        %2375 = vmatpush1.bf16.msra.mxu0 %v1342
        %2376 = vmatprep.subr.bf16.mxu0 0
        %2377 = vmatpush1.bf16.msra.mxu0 %v1347
        %2378 = vmatprep.subr.bf16.mxu0 0
        %2379 = vmatpush1.bf16.msra.mxu0 %v1352
        %2380 = vmatprep.subr.bf16.mxu0 0
        %2381 = vmatpush1.bf16.msra.mxu0 %v1357
        %2382 = vmatprep.subr.bf16.mxu0 0
        %2383 = vmatpush1.bf16.msra.mxu0 %v1362
        %2384 = vmatprep.subr.bf16.mxu0 0
        %2385 = vmatpush1.bf16.msra.mxu0 %v1367
        %2386 = vmatprep.subr.bf16.mxu0 0
        %2387 = vmatpush1.bf16.msra.mxu0 %v1372
        %2388 = vmatprep.subr.bf16.mxu0 0
        %2389 = vmatpush1.bf16.msra.mxu0 %v1377
        %2390 = vmatprep.mubr.bf16.mxu0 %v605
        %2391 = vmatmul.mubr.bf16.gmra.mrb[0].mxu0 %v604
        %v2392 = vpop.f32.mrb[0].mxu0
        %v2393 = vadd.f32 %v2296, %v2392
        %v2394 = vpop.f32.mrb[0].mxu0
        %v2395 = vpop.f32.mrb[0].mxu0
        %v2396 = vadd.f32 %v2299, %v2395
        %v2397 = vpop.f32.mrb[0].mxu0
        %2398 = vmatprep.mubr.bf16.mxu0 %v610
        %2399 = vmatmul.mubr.bf16.gmra.mrb[0].mxu0 %v609
        %v2400 = vpop.f32.mrb[0].mxu0
        %v2401 = vadd.f32 %v2304, %v2400
        %v2402 = vpop.f32.mrb[0].mxu0
        %v2403 = vpop.f32.mrb[0].mxu0
        %v2404 = vadd.f32 %v2307, %v2403
        %v2405 = vpop.f32.mrb[0].mxu0
        %2406 = vmatprep.mubr.bf16.mxu0 %v615
        %2407 = vmatmul.mubr.bf16.gmra.mrb[0].mxu0 %v614
        %v2408 = vpop.f32.mrb[0].mxu0
        %v2409 = vadd.f32 %v2312, %v2408
        %v2410 = vpop.f32.mrb[0].mxu0
        %v2411 = vpop.f32.mrb[0].mxu0
        %v2412 = vadd.f32 %v2315, %v2411
        %v2413 = vpop.f32.mrb[0].mxu0
        %2414 = vmatprep.mubr.bf16.mxu0 %v620
        %2415 = vmatmul.mubr.bf16.gmra.mrb[0].mxu0 %v619
        %v2416 = vpop.f32.mrb[0].mxu0
        %v2417 = vadd.f32 %v2320, %v2416
        %v2418 = vpop.f32.mrb[0].mxu0
        %v2419 = vpop.f32.mrb[0].mxu0
        %v2420 = vadd.f32 %v2323, %v2419
        %v2421 = vpop.f32.mrb[0].mxu0
        %2422 = vmatprep.mubr.bf16.mxu0 %v625
        %2423 = vmatmul.mubr.bf16.gmra.mrb[0].mxu0 %v624
        %v2424 = vpop.f32.mrb[0].mxu0
        %v2425 = vadd.f32 %v2328, %v2424
        %v2426 = vpop.f32.mrb[0].mxu0
        %v2427 = vpop.f32.mrb[0].mxu0
        %v2428 = vadd.f32 %v2331, %v2427
        %v2429 = vpop.f32.mrb[0].mxu0
        %2430 = vmatprep.mubr.bf16.mxu0 %v630
        %2431 = vmatmul.mubr.bf16.gmra.mrb[0].mxu0 %v629
        %v2432 = vpop.f32.mrb[0].mxu0
        %v2433 = vadd.f32 %v2336, %v2432
        %v2434 = vpop.f32.mrb[0].mxu0
        %v2435 = vpop.f32.mrb[0].mxu0
        %v2436 = vadd.f32 %v2339, %v2435
        %v2437 = vpop.f32.mrb[0].mxu0
        %2438 = vmatprep.mubr.bf16.mxu0 %v635
        %2439 = vmatmul.mubr.bf16.gmra.mrb[0].mxu0 %v634
        %v2440 = vpop.f32.mrb[0].mxu0
        %v2441 = vadd.f32 %v2344, %v2440
        %v2442 = vpop.f32.mrb[0].mxu0
        %v2443 = vpop.f32.mrb[0].mxu0
        %v2444 = vadd.f32 %v2347, %v2443
        %v2445 = vpop.f32.mrb[0].mxu0
        %2446 = vmatprep.mubr.bf16.mxu0 %v640
        %2447 = vmatmul.mubr.bf16.gmra.mrb[0].mxu0 %v639
        %v2448 = vpop.f32.mrb[0].mxu0
        %v2449 = vadd.f32 %v2352, %v2448
        %v2450 = vpop.f32.mrb[0].mxu0
        %v2451 = vpop.f32.mrb[0].mxu0
        %v2452 = vadd.f32 %v2355, %v2451
        %v2453 = vpop.f32.mrb[0].mxu0
        %2454 = vdwg.mxu0
        %2455 = vmatprep.subr.bf16.mxu0 0
        %2456 = vmatpush1.bf16.msra.mxu0 %v1382
        %2457 = vmatprep.subr.bf16.mxu0 0
        %2458 = vmatpush1.bf16.msra.mxu0 %v1387
        %2459 = vmatprep.subr.bf16.mxu0 0
        %2460 = vmatpush1.bf16.msra.mxu0 0
        %2461 = vmatprep.subr.bf16.mxu0 0
        %2462 = vmatpush1.bf16.msra.mxu0 0
        %2463 = vmatprep.subr.bf16.mxu0 0
        %2464 = vmatpush1.bf16.msra.mxu0 0
        %2465 = vmatprep.subr.bf16.mxu0 0
        %2466 = vmatpush1.bf16.msra.mxu0 0
        %2467 = vmatprep.subr.bf16.mxu0 0
        %2468 = vmatpush1.bf16.msra.mxu0 0
        %2469 = vmatprep.subr.bf16.mxu0 0
        %2470 = vmatpush1.bf16.msra.mxu0 0
        %2471 = vmatprep.subr.bf16.mxu0 0
        %2472 = vmatpush1.bf16.msra.mxu0 0
        %2473 = vmatprep.subr.bf16.mxu0 0
        %2474 = vmatpush1.bf16.msra.mxu0 0
        %2475 = vmatprep.subr.bf16.mxu0 0
        %2476 = vmatpush1.bf16.msra.mxu0 0
        %2477 = vmatprep.subr.bf16.mxu0 0
        %2478 = vmatpush1.bf16.msra.mxu0 0
        %2479 = vmatprep.subr.bf16.mxu0 0
        %2480 = vmatpush1.bf16.msra.mxu0 0
        %2481 = vmatprep.subr.bf16.mxu0 0
        %2482 = vmatpush1.bf16.msra.mxu0 0
        %2483 = vmatprep.subr.bf16.mxu0 0
        %2484 = vmatpush1.bf16.msra.mxu0 0
        %2485 = vmatprep.subr.bf16.mxu0 0
        %2486 = vmatpush1.bf16.msra.mxu0 0
        %2487 = vmatprep.mubr.bf16.mxu0 0
        %2488 = vmatmul.mubr.bf16.gmra.mrb[0].mxu0 %v1560
        %v2489 = vpop.f32.mrb[0].mxu0
        %v2490 = vadd.f32 %v2393, %v2489
        %v2491 = vpop.f32.mrb[0].mxu0
        %v2492 = vpop.f32.mrb[0].mxu0
        %v2493 = vadd.f32 %v2396, %v2492
        %v2494 = vpop.f32.mrb[0].mxu0
        %2495 = vmatprep.mubr.bf16.mxu0 0
        %2496 = vmatmul.mubr.bf16.gmra.mrb[0].mxu0 %v1563
        %v2497 = vpop.f32.mrb[0].mxu0
        %v2498 = vadd.f32 %v2401, %v2497
        %v2499 = vpop.f32.mrb[0].mxu0
        %v2500 = vpop.f32.mrb[0].mxu0
        %v2501 = vadd.f32 %v2404, %v2500
        %v2502 = vpop.f32.mrb[0].mxu0
        %2503 = vmatprep.mubr.bf16.mxu0 0
        %2504 = vmatmul.mubr.bf16.gmra.mrb[0].mxu0 %v1566
        %v2505 = vpop.f32.mrb[0].mxu0
        %v2506 = vadd.f32 %v2409, %v2505
        %v2507 = vpop.f32.mrb[0].mxu0
        %v2508 = vpop.f32.mrb[0].mxu0
        %v2509 = vadd.f32 %v2412, %v2508
        %v2510 = vpop.f32.mrb[0].mxu0
        %2511 = vmatprep.mubr.bf16.mxu0 0
        %2512 = vmatmul.mubr.bf16.gmra.mrb[0].mxu0 %v1569
        %v2513 = vpop.f32.mrb[0].mxu0
        %v2514 = vadd.f32 %v2417, %v2513
        %v2515 = vpop.f32.mrb[0].mxu0
        %v2516 = vpop.f32.mrb[0].mxu0
        %v2517 = vadd.f32 %v2420, %v2516
        %v2518 = vpop.f32.mrb[0].mxu0
        %2519 = vmatprep.mubr.bf16.mxu0 0
        %2520 = vmatmul.mubr.bf16.gmra.mrb[0].mxu0 %v1572
        %v2521 = vpop.f32.mrb[0].mxu0
        %v2522 = vadd.f32 %v2425, %v2521
        %v2523 = vpop.f32.mrb[0].mxu0
        %v2524 = vpop.f32.mrb[0].mxu0
        %v2525 = vadd.f32 %v2428, %v2524
        %v2526 = vpop.f32.mrb[0].mxu0
        %2527 = vmatprep.mubr.bf16.mxu0 0
        %2528 = vmatmul.mubr.bf16.gmra.mrb[0].mxu0 %v1575
        %v2529 = vpop.f32.mrb[0].mxu0
        %v2530 = vadd.f32 %v2433, %v2529
        %v2531 = vpop.f32.mrb[0].mxu0
        %v2532 = vpop.f32.mrb[0].mxu0
        %v2533 = vadd.f32 %v2436, %v2532
        %v2534 = vpop.f32.mrb[0].mxu0
        %2535 = vmatprep.mubr.bf16.mxu0 0
        %2536 = vmatmul.mubr.bf16.gmra.mrb[0].mxu0 %v1578
        %v2537 = vpop.f32.mrb[0].mxu0
        %v2538 = vadd.f32 %v2441, %v2537
        %v2539 = vpop.f32.mrb[0].mxu0
        %v2540 = vpop.f32.mrb[0].mxu0
        %v2541 = vadd.f32 %v2444, %v2540
        %v2542 = vpop.f32.mrb[0].mxu0
        %2543 = vmatprep.mubr.bf16.mxu0 0
        %2544 = vmatmul.mubr.bf16.gmra.mrb[0].mxu0 %v1581
        %v2545 = vpop.f32.mrb[0].mxu0
        %v2546 = vadd.f32 %v2449, %v2545
        %v2547 = vpop.f32.mrb[0].mxu0
        %v2548 = vpop.f32.mrb[0].mxu0
        %v2549 = vadd.f32 %v2452, %v2548
        %v2550 = vpop.f32.mrb[0].mxu0
        %2551 = vdwg.mxu0
        %2552 = vst [vmem:[%s192] sm:$0xff] %v1844
        %2553 = vst [vmem:[%s192 + $0x8] sm:$0xff] %v1846
        %2554 = vst [vmem:[%s192 + $0x10] sm:$0xff] %v2183
        %2555 = vst [vmem:[%s192 + $0x18] sm:$0xff] %v2185
        %2556 = vst.msk [vmem:[%s192 + $0x20] sm:$0xff] %vm1558, %v2490
        %2557 = vst [vmem:[%s192 + $0x28] sm:$0xff] %v1848
        %2558 = vst [vmem:[%s192 + $0x30] sm:$0xff] %v1850
        %2559 = vst [vmem:[%s192 + $0x38] sm:$0xff] %v2187
        %2560 = vst [vmem:[%s192 + $0x40] sm:$0xff] %v2189
        %2561 = vst.msk [vmem:[%s192 + $0x48] sm:$0xff] %vm1558, %v2493
        %2562 = vst [vmem:[%s192 + $0x50] sm:$0xff] %v1854
        %2563 = vst [vmem:[%s192 + $0x58] sm:$0xff] %v1856
        %2564 = vst [vmem:[%s192 + $0x60] sm:$0xff] %v2193
        %2565 = vst [vmem:[%s192 + $0x68] sm:$0xff] %v2195
        %2566 = vst.msk [vmem:[%s192 + $0x70] sm:$0xff] %vm1558, %v2498
        %2567 = vst [vmem:[%s192 + $0x78] sm:$0xff] %v1858
        %2568 = vst [vmem:[%s192 + $0x80] sm:$0xff] %v1860
        %2569 = vst [vmem:[%s192 + $0x88] sm:$0xff] %v2197
        %2570 = vst [vmem:[%s192 + $0x90] sm:$0xff] %v2199
        %2571 = vst.msk [vmem:[%s192 + $0x98] sm:$0xff] %vm1558, %v2501
        %2572 = vst [vmem:[%s192 + $0xa0] sm:$0xff] %v1864
        %2573 = vst [vmem:[%s192 + $0xa8] sm:$0xff] %v1866
        %2574 = vst [vmem:[%s192 + $0xb0] sm:$0xff] %v2203
        %2575 = vst [vmem:[%s192 + $0xb8] sm:$0xff] %v2205
        %2576 = vst.msk [vmem:[%s192 + $0xc0] sm:$0xff] %vm1558, %v2506
        %2577 = vst [vmem:[%s192 + $0xc8] sm:$0xff] %v1868
        %2578 = vst [vmem:[%s192 + $0xd0] sm:$0xff] %v1870
        %2579 = vst [vmem:[%s192 + $0xd8] sm:$0xff] %v2207
        %2580 = vst [vmem:[%s192 + $0xe0] sm:$0xff] %v2209
        %2581 = vst.msk [vmem:[%s192 + $0xe8] sm:$0xff] %vm1558, %v2509
        %2582 = vst [vmem:[%s192 + $0xf0] sm:$0xff] %v1874
        %2583 = vst [vmem:[%s192 + $0xf8] sm:$0xff] %v1876
        %2584 = vst [vmem:[%s192 + $0x100] sm:$0xff] %v2213
        %2585 = vst [vmem:[%s192 + $0x108] sm:$0xff] %v2215
        %2586 = vst.msk [vmem:[%s192 + $0x110] sm:$0xff] %vm1558, %v2514
        %2587 = vst [vmem:[%s192 + $0x118] sm:$0xff] %v1878
        %2588 = vst [vmem:[%s192 + $0x120] sm:$0xff] %v1880
        %2589 = vst [vmem:[%s192 + $0x128] sm:$0xff] %v2217
        %2590 = vst [vmem:[%s192 + $0x130] sm:$0xff] %v2219
        %2591 = vst.msk [vmem:[%s192 + $0x138] sm:$0xff] %vm1558, %v2517
        %2592 = vst [vmem:[%s192 + $0x140] sm:$0xff] %v1884
        %2593 = vst [vmem:[%s192 + $0x148] sm:$0xff] %v1886
        %2594 = vst [vmem:[%s192 + $0x150] sm:$0xff] %v2223
        %2595 = vst [vmem:[%s192 + $0x158] sm:$0xff] %v2225
        %2596 = vst.msk [vmem:[%s192 + $0x160] sm:$0xff] %vm1558, %v2522
        %2597 = vst [vmem:[%s192 + $0x168] sm:$0xff] %v1888
        %2598 = vst [vmem:[%s192 + $0x170] sm:$0xff] %v1890
        %2599 = vst [vmem:[%s192 + $0x178] sm:$0xff] %v2227
        %2600 = vst [vmem:[%s192 + $0x180] sm:$0xff] %v2229
        %2601 = vst.msk [vmem:[%s192 + $0x188] sm:$0xff] %vm1558, %v2525
        %2602 = vst [vmem:[%s192 + $0x190] sm:$0xff] %v1894
        %2603 = vst [vmem:[%s192 + $0x198] sm:$0xff] %v1896
        %2604 = vst [vmem:[%s192 + $0x1a0] sm:$0xff] %v2233
        %2605 = vst [vmem:[%s192 + $0x1a8] sm:$0xff] %v2235
        %2606 = vst.msk [vmem:[%s192 + $0x1b0] sm:$0xff] %vm1558, %v2530
        %2607 = vst [vmem:[%s192 + $0x1b8] sm:$0xff] %v1898
        %2608 = vst [vmem:[%s192 + $0x1c0] sm:$0xff] %v1900
        %2609 = vst [vmem:[%s192 + $0x1c8] sm:$0xff] %v2237
        %2610 = vst [vmem:[%s192 + $0x1d0] sm:$0xff] %v2239
        %2611 = vst.msk [vmem:[%s192 + $0x1d8] sm:$0xff] %vm1558, %v2533
        %2612 = vst [vmem:[%s192 + $0x1e0] sm:$0xff] %v1904
        %2613 = vst [vmem:[%s192 + $0x1e8] sm:$0xff] %v1906
        %2614 = vst [vmem:[%s192 + $0x1f0] sm:$0xff] %v2243
        %2615 = vst [vmem:[%s192 + $0x1f8] sm:$0xff] %v2245
        %2616 = vst.msk [vmem:[%s192 + $0x200] sm:$0xff] %vm1558, %v2538
        %2617 = vst [vmem:[%s192 + $0x208] sm:$0xff] %v1908
        %2618 = vst [vmem:[%s192 + $0x210] sm:$0xff] %v1910
        %2619 = vst [vmem:[%s192 + $0x218] sm:$0xff] %v2247
        %2620 = vst [vmem:[%s192 + $0x220] sm:$0xff] %v2249
        %2621 = vst.msk [vmem:[%s192 + $0x228] sm:$0xff] %vm1558, %v2541
        %2622 = vst [vmem:[%s192 + $0x230] sm:$0xff] %v1914
        %2623 = vst [vmem:[%s192 + $0x238] sm:$0xff] %v1916
        %2624 = vst [vmem:[%s192 + $0x240] sm:$0xff] %v2253
        %2625 = vst [vmem:[%s192 + $0x248] sm:$0xff] %v2255
        %2626 = vst.msk [vmem:[%s192 + $0x250] sm:$0xff] %vm1558, %v2546
        %2627 = vst [vmem:[%s192 + $0x258] sm:$0xff] %v1918
        %2628 = vst [vmem:[%s192 + $0x260] sm:$0xff] %v1920
        %2629 = vst [vmem:[%s192 + $0x268] sm:$0xff] %v2257
        %2630 = vst [vmem:[%s192 + $0x270] sm:$0xff] %v2259
        %2631 = vst.msk [vmem:[%s192 + $0x278] sm:$0xff] %vm1558, %v2549
        %s2632 = smul.u32 16, %s15
        %p2633 = scmp.lt.s32.totalorder %s2632, 31
        %s2634 = scalar_select %p2633, %s2632, 31
        %s2635 = smul.addr %s2634, 5
        %s2636 = smul.addr %s2635, 8
        %s2637 = scalar_lea.vmem %s3, %s2636
        // Predicated region
        $region37: #{tpu_custom_call.1} parent=31 // pred_check
          %p2638 = pneg %p101
        $region38: #{tpu_custom_call.1} parent=31 // pred_check_branch
          %2640 = sbr.rel (%p2638) target = $region40
        $region39: #{tpu_custom_call.1} parent=31 // pred_region
          %s2641 = smul.u32 16, %s15
        $region40: #{tpu_custom_call.1} parent=31 // pred_fallthru
          _
      $region32: #{tpu_custom_call.1} parent=5 // pred_fallthru
        _
      %p2642 = scmp.le.s32.totalorder 2, %s10
      // Predicated region
      $region41: #{tpu_custom_call.1} parent=5 // pred_check
        %p2643 = pneg %p2642
      $region42: #{tpu_custom_call.1} parent=5 // pred_check_branch
        %2645 = sbr.rel (%p2643) target = $region44
      $region43: #{tpu_custom_call.1} parent=5 // pred_region
        %s2646 = ssub.s32 %s10, 2
        // Predicated region
        $region45: #{tpu_custom_call.1} parent=43 // pred_check
          %p2647 = pneg %p107
        $region46: #{tpu_custom_call.1} parent=43 // pred_check_branch
          %2649 = sbr.rel (%p2647) target = $region48
        $region47: #{tpu_custom_call.1} parent=43 // pred_region
          %s2650 = smul.u32 16, %s16
          %p2651 = scmp.lt.s32.totalorder %s2650, 31
          %s2652 = scalar_select %p2651, %s2650, 31
          %s2653 = smul.addr %s2652, 5
          %s2654 = smul.addr %s2653, 8
          %s2655 = scalar_lea.vmem %s3, %s2654
        $region48: #{tpu_custom_call.1} parent=43 // pred_fallthru
          _
      $region44: #{tpu_custom_call.1} parent=5 // pred_fallthru
        _
    $region6: #{tpu_custom_call.1} parent=1 // loop_footer
      %s14 = sadd.s32 1, %s10
    $region7: #{tpu_custom_call.1} parent=1 // loop_footer_branch
      %9 = sbr.rel target = $region3
    $region8: #{tpu_custom_call.1} parent=1 // loop_exit
      _
    %2656 = vsyncpa [#allocation3], 1
    %s2657 = scalar_lea.sflag [#allocation3], 1
    %2658 = vsyncpa %s2657, 1

</llo_original>
